<compile_context>
chip_gen: v6e
topology: v6e:2x2x1
jax: 0.10.0
libtpu: 0.0.40
codegen_flags: <defaults>
</compile_context>

<pallas_src>
import functools

import numpy as np
import jax
import jax.numpy as jnp
from jax.experimental import pallas as pl
from jax.experimental.pallas import tpu as pltpu


def _round_up(x: int, m: int) -> int:
    return (x + m - 1) // m * m


# --------------------------------------------------------------------------
# Stage 1: fused sensor-embed + time-encode + masked mean pooling over T.
# --------------------------------------------------------------------------
def _pool_embed_kernel(x_ref, m_ref, t_ref, wx_ref, wm_ref, wt_ref, b_ref,
                       out_ref, acc_ref, cnt_ref, *, use_bf16_mxu):
    t_idx = pl.program_id(1)

    @pl.when(t_idx == 0)
    def _init():
        acc_ref[...] = jnp.zeros_like(acc_ref)
        cnt_ref[...] = jnp.zeros_like(cnt_ref)

    xt = x_ref[0]          # (T_tile, S_pad)  f32
    mt = m_ref[0]          # (T_tile, S_pad)  f32
    tv = t_ref[0]          # (T_tile, 1)      f32

    # Valid-timestep mask == torch `sum(concat(x, mask) != 0, dim=2) > 0`,
    # computed without materializing the concat.  Zero T/S padding rows give
    # mask == 0 and thus contribute nothing to sum or count.
    nz = (jnp.sum((xt != 0.0).astype(jnp.float32), axis=-1, keepdims=True)
          + jnp.sum((mt != 0.0).astype(jnp.float32), axis=-1, keepdims=True))
    row_mask = (nz > 0.0).astype(jnp.float32)                   # (T_tile, 1)

    dot_dtype = jnp.bfloat16 if use_bf16_mxu else jnp.float32
    # concat split into two accumulating MXU matmuls, f32 accumulation.
    h = jnp.dot(xt.astype(dot_dtype), wx_ref[...].astype(dot_dtype),
                preferred_element_type=jnp.float32)
    h = h + jnp.dot(mt.astype(dot_dtype), wm_ref[...].astype(dot_dtype),
                    preferred_element_type=jnp.float32)
    # Time encoding Linear(1, D) computed in-kernel (bias folded into b_ref).
    h = h + tv * wt_ref[...] + b_ref[...]                       # (T_tile, D_pad)

    acc_ref[...] += jnp.sum(h * row_mask, axis=0, keepdims=True)     # (1, D_pad)
    cnt_ref[...] += jnp.sum(row_mask, axis=0, keepdims=True)         # (1, 1)

    @pl.when(t_idx == pl.num_programs(1) - 1)
    def _finalize():
        cnt = jnp.maximum(cnt_ref[...], 1e-9)        # torch.clamp(min=1e-9)
        inv = pl.reciprocal(cnt, approx=False)       # exact; approx=True is EUP-cheap
        out_ref[0] = acc_ref[...] * inv


def _masked_mean_embed(x, sensor_mask, times, w_se, b_se, w_te, b_te,
                       *, t_tile=256, use_bf16_mxu=False):
    B, S, T = x.shape
    D = w_se.shape[0]
    assert w_se.shape[1] == 2 * S, "sensor_embedding expects 2*sensors inputs"

    D_pad = _round_up(D, 128)
    S_pad = _round_up(S, 8)                       # 8-aligned, NOT 128 (see header)
    t_tile = _round_up(max(int(t_tile), 8), 8)
    t_tile_eff = min(_round_up(T, 8), t_tile)
    T_pad = _round_up(T, t_tile_eff)
    n_t = T_pad // t_tile_eff

    # Layout plumbing in XLA (free relative to in-kernel XLU work).
    xt = jnp.transpose(x.astype(jnp.float32), (0, 2, 1))            # (B, T, S)
    mt = jnp.transpose(sensor_mask.astype(jnp.float32), (0, 2, 1))  # (B, T, S)
    xt = jnp.pad(xt, ((0, 0), (0, T_pad - T), (0, S_pad - S)))
    mt = jnp.pad(mt, ((0, 0), (0, T_pad - T), (0, S_pad - S)))
    tv = jnp.pad(times.astype(jnp.float32), ((0, 0), (0, T_pad - T)))[..., None]

    # Split the concat(x, mask) weight into two halves; zero-pad to (S_pad, D_pad).
    w_full = jnp.asarray(w_se, jnp.float32).T                       # (2S, D)
    wx = jnp.zeros((S_pad, D_pad), jnp.float32).at[:S, :D].set(w_full[:S])
    wm = jnp.zeros((S_pad, D_pad), jnp.float32).at[:S, :D].set(w_full[S:])
    wt = jnp.zeros((1, D_pad), jnp.float32).at[0, :D].set(
        jnp.asarray(w_te, jnp.float32)[:, 0])
    bb = jnp.zeros((1, D_pad), jnp.float32).at[0, :D].set(
        jnp.asarray(b_se, jnp.float32) + jnp.asarray(b_te, jnp.float32))

    kernel = functools.partial(_pool_embed_kernel, use_bf16_mxu=use_bf16_mxu)
    pooled = pl.pallas_call(
        kernel,
        out_shape=jax.ShapeDtypeStruct((B, 1, D_pad), jnp.float32),
        grid_spec=pltpu.PrefetchScalarGridSpec(
            num_scalar_prefetch=0,
            grid=(B, n_t),                               # B parallel, T arbitrary (last)
            in_specs=[
                pl.BlockSpec((1, t_tile_eff, S_pad), lambda b, t: (b, t, 0)),
                pl.BlockSpec((1, t_tile_eff, S_pad), lambda b, t: (b, t, 0)),
                pl.BlockSpec((1, t_tile_eff, 1), lambda b, t: (b, t, 0)),
                pl.BlockSpec((S_pad, D_pad), lambda b, t: (0, 0)),
                pl.BlockSpec((S_pad, D_pad), lambda b, t: (0, 0)),
                pl.BlockSpec((1, D_pad), lambda b, t: (0, 0)),
                pl.BlockSpec((1, D_pad), lambda b, t: (0, 0)),
            ],
            out_specs=pl.BlockSpec((1, 1, D_pad), lambda b, t: (b, 0, 0)),
            scratch_shapes=[
                pltpu.VMEM((1, D_pad), jnp.float32),     # sum(mask * h)
                pltpu.VMEM((1, 1), jnp.float32),         # sum(mask)
            ],
        ),
        compiler_params=pltpu.CompilerParams(
            dimension_semantics=("parallel", "arbitrary"),
            # Explicit limit sized for v7x's 64 MiB VMEM (footprint here is far
            # below it; also fine on v5e/v6e).
            vmem_limit_bytes=48 * 1024 * 1024,
        ),
    )(xt, mt, tv, wx, wm, wt, bb)

    return pooled[:, 0, :], D_pad                      # (B, D_pad); cols >= D are zero


# --------------------------------------------------------------------------
# Stage 2: static embedding + merger + ReLU + classifier, one batched MXU call.
# --------------------------------------------------------------------------
def _head_kernel(pooled_ref, st_ref, wst_ref, bst_ref, wmp_ref, wms_ref,
                 bm_ref, wc_ref, bc_ref, out_ref):
    st_emb = jnp.dot(st_ref[...], wst_ref[...],
                     preferred_element_type=jnp.float32) + bst_ref[...]
    merged = jnp.dot(pooled_ref[...], wmp_ref[...],
                     preferred_element_type=jnp.float32)
    merged = merged + jnp.dot(st_emb, wms_ref[...],
                              preferred_element_type=jnp.float32)
    merged = jnp.maximum(merged + bm_ref[...], 0.0)
    out_ref[...] = jnp.dot(merged, wc_ref[...],
                           preferred_element_type=jnp.float32) + bc_ref[...]


def _classifier_head(pooled_pad, static, w_st, b_st, w_mg, b_mg, w_cl, b_cl, D):
    B, D_pad = pooled_pad.shape
    Cs = static.shape[1]
    M = w_mg.shape[0]              # D + Cs
    C = w_cl.shape[0]

    B_pad = _round_up(B, 8)
    Cs_pad = _round_up(Cs, 128)
    M_pad = _round_up(M, 128)
    C_pad = _round_up(C, 128)

    pooled_p = jnp.zeros((B_pad, D_pad), jnp.float32).at[:B].set(pooled_pad)
    st_p = jnp.zeros((B_pad, Cs_pad), jnp.float32).at[:B, :Cs].set(
        static.astype(jnp.float32))

    wst = jnp.zeros((Cs_pad, Cs_pad), jnp.float32).at[:Cs, :Cs].set(
        jnp.asarray(w_st, jnp.float32).T)
    bst = jnp.zeros((1, Cs_pad), jnp.float32).at[0, :Cs].set(
        jnp.asarray(b_st, jnp.float32))

    wm_t = jnp.asarray(w_mg, jnp.float32).T            # (M, M)
    wmp = jnp.zeros((D_pad, M_pad), jnp.float32).at[:D, :M].set(wm_t[:D])
    wms = jnp.zeros((Cs_pad, M_pad), jnp.float32).at[:Cs, :M].set(wm_t[D:])
    bm = jnp.zeros((1, M_pad), jnp.float32).at[0, :M].set(
        jnp.asarray(b_mg, jnp.float32))

    wc = jnp.zeros((M_pad, C_pad), jnp.float32).at[:M, :C].set(
        jnp.asarray(w_cl, jnp.float32).T)
    bc = jnp.zeros((1, C_pad), jnp.float32).at[0, :C].set(
        jnp.asarray(b_cl, jnp.float32))

    out = pl.pallas_call(
        _head_kernel,
        out_shape=jax.ShapeDtypeStruct((B_pad, C_pad), jnp.float32),
    )(pooled_p, st_p, wst, bst, wmp, wms, bm, wc, bc)
    return out[:B, :C]


# --------------------------------------------------------------------------
# Full forward (== EncoderClassifierMamba.forward with pooling='mean').
# --------------------------------------------------------------------------
def encoder_classifier_mamba_forward(x, static, times, sensor_mask, params,
                                     *, t_tile=256, use_bf16_mxu=False):
    pooled_pad, _ = _masked_mean_embed(
        x, sensor_mask, times,
        params["w_se"], params["b_se"], params["w_te"], params["b_te"],
        t_tile=t_tile, use_bf16_mxu=use_bf16_mxu)
    D = params["w_se"].shape[0]
    return _classifier_head(
        pooled_pad, static,
        params["w_st"], params["b_st"],
        params["w_mg"], params["b_mg"],
        params["w_cl"], params["b_cl"], D)


# --------------------------------------------------------------------------
# Pure NumPy (float64) reference of the PyTorch forward, for self-check.
# --------------------------------------------------------------------------
def _reference_forward_np(x, static, times, sensor_mask, params):
    f = lambda a: np.asarray(a, dtype=np.float64)
    x, static, times, sm = f(x), f(static), f(times), f(sensor_mask)
    p = {k: f(v) for k, v in params.items()}

    xt = np.transpose(x, (0, 2, 1))
    mt = np.transpose(sm, (0, 2, 1))
    cat = np.concatenate([xt, mt], axis=2)                        # (B, T, 2S)
    step_mask = (np.sum(cat != 0, axis=2) > 0).astype(np.float64)  # (B, T)

    h = cat @ p["w_se"].T + p["b_se"]
    h = h + times[..., None] * p["w_te"][:, 0] + p["b_te"]

    num = np.sum(h * step_mask[..., None], axis=1)
    den = np.maximum(step_mask.sum(axis=1, keepdims=True), 1e-9)
    pooled = num / den

    st_emb = static @ p["w_st"].T + p["b_st"]
    comb = np.concatenate([pooled, st_emb], axis=1)
    merged = np.maximum(comb @ p["w_mg"].T + p["b_mg"], 0.0)
    return merged @ p["w_cl"].T + p["b_cl"]


if __name__ == "__main__":
    # Small shapes consistent with the module:
    #   batch B=2, sensors S=6 (features 2S=12), time steps T=16,
    #   static_count=4, d_model=32, num_classes=2.
    B, S, T, Cs, D, C = 2, 6, 16, 4, 32, 2
    M = D + Cs

    root = jax.random.PRNGKey(0)
    ks = jax.random.split(root, 16)

    x = jax.random.normal(ks[0], (B, S, T), jnp.float32)
    sensor_mask = (jax.random.uniform(ks[1], (B, S, T)) < 0.7).astype(jnp.float32)
    # Zero out a few whole time steps so the valid-step mask path is exercised.
    keep = jnp.ones((1, 1, T), jnp.float32).at[:, :, T - 3:].set(0.0)
    sensor_mask = sensor_mask * keep
    x = x * sensor_mask
    times = jnp.cumsum(jax.random.uniform(ks[2], (B, T)), axis=1)
    static = jax.random.normal(ks[3], (B, Cs), jnp.float32)

    def _lin(kk, fan_in, shape):
        bound = 1.0 / float(fan_in) ** 0.5
        return jax.random.uniform(kk, shape, jnp.float32, -bound, bound)

    params = {
        "w_se": _lin(ks[4], 2 * S, (D, 2 * S)),
        "b_se": _lin(ks[5], 2 * S, (D,)),
        "w_te": _lin(ks[6], 1, (D, 1)),
        "b_te": _lin(ks[7], 1, (D,)),
        "w_st": _lin(ks[8], Cs, (Cs, Cs)),
        "b_st": _lin(ks[9], Cs, (Cs,)),
        "w_mg": _lin(ks[10], M, (M, M)),
        "b_mg": _lin(ks[11], M, (M,)),
        "w_cl": _lin(ks[12], M, (C, M)),
        "b_cl": _lin(ks[13], M, (C,)),
    }

    fwd = jax.jit(functools.partial(
        encoder_classifier_mamba_forward, t_tile=256, use_bf16_mxu=False))
    logits = jax.block_until_ready(fwd(x, static, times, sensor_mask, params))

    ref = _reference_forward_np(x, static, times, sensor_mask, params)
    got = np.asarray(logits, np.float64)
    if not np.allclose(got, ref, rtol=1e-3, atol=1e-3):
        raise AssertionError(
            f"kernel/reference mismatch, max abs err={np.max(np.abs(got - ref))}")

    print("KERNEL_OK")
</pallas_src>

<mosaic_0001>
module attributes {stable_mosaic.version = 11 : i64} {
  func.func @_pool_embed_kernel(%arg0: i32, %arg1: i32, %arg2: memref<1x16x8xf32, #tpu.memory_space<vmem>>, %arg3: memref<1x16x8xf32, #tpu.memory_space<vmem>>, %arg4: memref<1x16x1xf32, #tpu.memory_space<vmem>>, %arg5: memref<8x128xf32, #tpu.memory_space<vmem>>, %arg6: memref<8x128xf32, #tpu.memory_space<vmem>>, %arg7: memref<1x128xf32, #tpu.memory_space<vmem>>, %arg8: memref<1x128xf32, #tpu.memory_space<vmem>>, %arg9: memref<1x1x128xf32, #tpu.memory_space<vmem>>, %arg10: memref<1x128xf32, #tpu.memory_space<vmem>>, %arg11: memref<1x1xf32, #tpu.memory_space<vmem>>) attributes {dimension_semantics = [#tpu.dimension_semantics<parallel>, #tpu.dimension_semantics<arbitrary>], iteration_bounds = array<i64: 2, 1>, scalar_prefetch = 0 : i64, scratch_operands = 2 : i64, tpu.core_type = #tpu.core_type<tc>, window_params = [{transform_indices = @transform_0, window_bounds = array<i64: 1, 16, 8>}, {transform_indices = @transform_1, window_bounds = array<i64: 1, 16, 8>}, {transform_indices = @transform_2, window_bounds = array<i64: 1, 16, 1>}, {pipeline_mode = #tpu.pipeline_mode<synchronous>, transform_indices = @transform_3, window_bounds = array<i64: 8, 128>}, {pipeline_mode = #tpu.pipeline_mode<synchronous>, transform_indices = @transform_4, window_bounds = array<i64: 8, 128>}, {pipeline_mode = #tpu.pipeline_mode<synchronous>, transform_indices = @transform_5, window_bounds = array<i64: 1, 128>}, {pipeline_mode = #tpu.pipeline_mode<synchronous>, transform_indices = @transform_6, window_bounds = array<i64: 1, 128>}, {transform_indices = @transform_7, window_bounds = array<i64: 1, 1, 128>}]} {
    %c0_i32 = arith.constant 0 : i32
    %0 = arith.cmpi eq, %arg1, %c0_i32 : i32
    %1 = arith.extui %0 : i1 to i32
    %c0_i32_0 = arith.constant 0 : i32
    %2 = arith.cmpi ne, %1, %c0_i32_0 : i32
    scf.if %2 {
      %cst_35 = arith.constant 0.000000e+00 : f32
      %54 = vector.broadcast %cst_35 : f32 to vector<1x128xf32>
      %c0_36 = arith.constant 0 : index
      %c0_37 = arith.constant 0 : index
      %55 = vector.load %arg10[%c0_36, %c0_37] : memref<1x128xf32, #tpu.memory_space<vmem>>, vector<1x128xf32>
      tpu.vector_store %arg10[%c0_36, %c0_37], %54 {strides = array<i32>} : memref<1x128xf32, #tpu.memory_space<vmem>>, vector<1x128xf32>,
      %cst_38 = arith.constant 0.000000e+00 : f32
      %56 = vector.broadcast %cst_38 : f32 to vector<1x1xf32>
      %c0_39 = arith.constant 0 : index
      %c0_40 = arith.constant 0 : index
      %57 = vector.load %arg11[%c0_39, %c0_40] : memref<1x1xf32, #tpu.memory_space<vmem>>, vector<1x1xf32>
      tpu.vector_store %arg11[%c0_39, %c0_40], %56 {strides = array<i32>} : memref<1x1xf32, #tpu.memory_space<vmem>>, vector<1x1xf32>,
    } else {
    }
    %c0 = arith.constant 0 : index
    %c0_1 = arith.constant 0 : index
    %c0_2 = arith.constant 0 : index
    %3 = vector.load %arg2[%c0, %c0_1, %c0_2] : memref<1x16x8xf32, #tpu.memory_space<vmem>>, vector<1x16x8xf32>
    %4 = vector.shape_cast %3 : vector<1x16x8xf32> to vector<16x8xf32>
    %c0_3 = arith.constant 0 : index
    %c0_4 = arith.constant 0 : index
    %c0_5 = arith.constant 0 : index
    %5 = vector.load %arg3[%c0_3, %c0_4, %c0_5] : memref<1x16x8xf32, #tpu.memory_space<vmem>>, vector<1x16x8xf32>
    %6 = vector.shape_cast %5 : vector<1x16x8xf32> to vector<16x8xf32>
    %c0_6 = arith.constant 0 : index
    %c0_7 = arith.constant 0 : index
    %c0_8 = arith.constant 0 : index
    %7 = vector.load %arg4[%c0_6, %c0_7, %c0_8] : memref<1x16x1xf32, #tpu.memory_space<vmem>>, vector<1x16x1xf32>
    %8 = vector.shape_cast %7 : vector<1x16x1xf32> to vector<16x1xf32>
    %cst = arith.constant 0.000000e+00 : f32
    %9 = vector.broadcast %cst : f32 to vector<16x8xf32>
    %10 = arith.cmpf one, %4, %9 : vector<16x8xf32>
    %11 = arith.extui %10 : vector<16x8xi1> to vector<16x8xi32>
    %12 = arith.sitofp %11 : vector<16x8xi32> to vector<16x8xf32>
    %cst_9 = arith.constant dense<0.000000e+00> : vector<16xf32>
    %13 = vector.multi_reduction <add>, %12, %cst_9 [1] : vector<16x8xf32> to vector<16xf32>
    %14 = vector.shape_cast %13 : vector<16xf32> to vector<16x1xf32>
    %cst_10 = arith.constant 0.000000e+00 : f32
    %15 = vector.broadcast %cst_10 : f32 to vector<16x8xf32>
    %16 = arith.cmpf one, %6, %15 : vector<16x8xf32>
    %17 = arith.extui %16 : vector<16x8xi1> to vector<16x8xi32>
    %18 = arith.sitofp %17 : vector<16x8xi32> to vector<16x8xf32>
    %cst_11 = arith.constant dense<0.000000e+00> : vector<16xf32>
    %19 = vector.multi_reduction <add>, %18, %cst_11 [1] : vector<16x8xf32> to vector<16xf32>
    %20 = vector.shape_cast %19 : vector<16xf32> to vector<16x1xf32>
    %21 = arith.addf %14, %20 : vector<16x1xf32>
    %cst_12 = arith.constant 0.000000e+00 : f32
    %22 = vector.broadcast %cst_12 : f32 to vector<16x1xf32>
    %23 = arith.cmpf ogt, %21, %22 : vector<16x1xf32>
    %24 = arith.extui %23 : vector<16x1xi1> to vector<16x1xi32>
    %25 = arith.sitofp %24 : vector<16x1xi32> to vector<16x1xf32>
    %c0_13 = arith.constant 0 : index
    %c0_14 = arith.constant 0 : index
    %26 = vector.load %arg5[%c0_13, %c0_14] : memref<8x128xf32, #tpu.memory_space<vmem>>, vector<8x128xf32>
    %cst_15 = arith.constant dense<0.000000e+00> : vector<16x128xf32>
    %27 = tpu.matmul %4, %26, %cst_15 {dimension_numbers = #tpu.dot_dimension_numbers<[1], [0], [0], [1], [0, 0, 1, 1], [], []>} : vector<16x8xf32>, vector<8x128xf32>, vector<16x128xf32> -> vector<16x128xf32>
    %c0_16 = arith.constant 0 : index
    %c0_17 = arith.constant 0 : index
    %28 = vector.load %arg6[%c0_16, %c0_17] : memref<8x128xf32, #tpu.memory_space<vmem>>, vector<8x128xf32>
    %cst_18 = arith.constant dense<0.000000e+00> : vector<16x128xf32>
    %29 = tpu.matmul %6, %28, %cst_18 {dimension_numbers = #tpu.dot_dimension_numbers<[1], [0], [0], [1], [0, 0, 1, 1], [], []>} : vector<16x8xf32>, vector<8x128xf32>, vector<16x128xf32> -> vector<16x128xf32>
    %30 = arith.addf %27, %29 : vector<16x128xf32>
    %c0_19 = arith.constant 0 : index
    %c0_20 = arith.constant 0 : index
    %31 = vector.load %arg7[%c0_19, %c0_20] : memref<1x128xf32, #tpu.memory_space<vmem>>, vector<1x128xf32>
    %32 = vector.broadcast %8 : vector<16x1xf32> to vector<16x128xf32>
    %33 = vector.broadcast %31 : vector<1x128xf32> to vector<16x128xf32>
    %34 = arith.mulf %32, %33 : vector<16x128xf32>
    %35 = arith.addf %30, %34 : vector<16x128xf32>
    %c0_21 = arith.constant 0 : index
    %c0_22 = arith.constant 0 : index
    %36 = vector.load %arg8[%c0_21, %c0_22] : memref<1x128xf32, #tpu.memory_space<vmem>>, vector<1x128xf32>
    %37 = vector.broadcast %36 : vector<1x128xf32> to vector<16x128xf32>
    %38 = arith.addf %35, %37 : vector<16x128xf32>
    %c0_23 = arith.constant 0 : index
    %c0_24 = arith.constant 0 : index
    %39 = vector.load %arg10[%c0_23, %c0_24] : memref<1x128xf32, #tpu.memory_space<vmem>>, vector<1x128xf32>
    %40 = vector.broadcast %25 : vector<16x1xf32> to vector<16x128xf32>
    %41 = arith.mulf %38, %40 : vector<16x128xf32>
    %cst_25 = arith.constant dense<0.000000e+00> : vector<128xf32>
    %42 = vector.multi_reduction <add>, %41, %cst_25 [0] : vector<16x128xf32> to vector<128xf32>
    %43 = vector.shape_cast %42 : vector<128xf32> to vector<1x128xf32>
    %44 = arith.addf %39, %43 : vector<1x128xf32>
    %c0_26 = arith.constant 0 : index
    %c0_27 = arith.constant 0 : index
    %45 = vector.load %arg10[%c0_26, %c0_27] : memref<1x128xf32, #tpu.memory_space<vmem>>, vector<1x128xf32>
    tpu.vector_store %arg10[%c0_26, %c0_27], %44 {strides = array<i32>} : memref<1x128xf32, #tpu.memory_space<vmem>>, vector<1x128xf32>,
    %c0_28 = arith.constant 0 : index
    %c0_29 = arith.constant 0 : index
    %46 = vector.load %arg11[%c0_28, %c0_29] : memref<1x1xf32, #tpu.memory_space<vmem>>, vector<1x1xf32>
    %cst_30 = arith.constant dense<0.000000e+00> : vector<1xf32>
    %47 = vector.multi_reduction <add>, %25, %cst_30 [0] : vector<16x1xf32> to vector<1xf32>
    %48 = vector.shape_cast %47 : vector<1xf32> to vector<1x1xf32>
    %49 = arith.addf %46, %48 : vector<1x1xf32>
    %c0_31 = arith.constant 0 : index
    %c0_32 = arith.constant 0 : index
    %50 = vector.load %arg11[%c0_31, %c0_32] : memref<1x1xf32, #tpu.memory_space<vmem>>, vector<1x1xf32>
    tpu.vector_store %arg11[%c0_31, %c0_32], %49 {strides = array<i32>} : memref<1x1xf32, #tpu.memory_space<vmem>>, vector<1x1xf32>,
    %c0_i32_33 = arith.constant 0 : i32
    %51 = arith.cmpi eq, %arg1, %c0_i32_33 : i32
    %52 = arith.extui %51 : i1 to i32
    %c0_i32_34 = arith.constant 0 : i32
    %53 = arith.cmpi ne, %52, %c0_i32_34 : i32
    scf.if %53 {
      %c0_35 = arith.constant 0 : index
      %c0_36 = arith.constant 0 : index
      %54 = vector.load %arg11[%c0_35, %c0_36] : memref<1x1xf32, #tpu.memory_space<vmem>>, vector<1x1xf32>
      %cst_37 = arith.constant 9.99999971E-10 : f32
      %55 = vector.broadcast %cst_37 : f32 to vector<1x1xf32>
      %56 = arith.maximumf %54, %55 : vector<1x1xf32>
      %57 = tpu.reciprocal %56 : vector<1x1xf32> -> vector<1x1xf32>
      %c0_38 = arith.constant 0 : index
      %c0_39 = arith.constant 0 : index
      %58 = vector.load %arg10[%c0_38, %c0_39] : memref<1x128xf32, #tpu.memory_space<vmem>>, vector<1x128xf32>
      %59 = vector.broadcast %57 : vector<1x1xf32> to vector<1x128xf32>
      %60 = arith.mulf %58, %59 : vector<1x128xf32>
      %c0_40 = arith.constant 0 : index
      %c0_41 = arith.constant 0 : index
      %c0_42 = arith.constant 0 : index
      %61 = vector.load %arg9[%c0_40, %c0_41, %c0_42] : memref<1x1x128xf32, #tpu.memory_space<vmem>>, vector<1x1x128xf32>
      %62 = vector.shape_cast %61 : vector<1x1x128xf32> to vector<1x128xf32>
      %63 = vector.shape_cast %60 : vector<1x128xf32> to vector<1x1x128xf32>
      tpu.vector_store %arg9[%c0_40, %c0_41, %c0_42], %63 {strides = array<i32>} : memref<1x1x128xf32, #tpu.memory_space<vmem>>, vector<1x1x128xf32>,
    } else {
    }
    return
  }
  func.func @transform_0(%arg0: i32, %arg1: i32) -> (i32, i32, i32) {
    %c0_i32 = arith.constant 0 : i32
    %c0_i32_0 = arith.constant 0 : i32
    return %arg0, %arg1, %c0_i32 : i32, i32, i32
  }
  func.func @transform_1(%arg0: i32, %arg1: i32) -> (i32, i32, i32) {
    %c0_i32 = arith.constant 0 : i32
    %c0_i32_0 = arith.constant 0 : i32
    return %arg0, %arg1, %c0_i32 : i32, i32, i32
  }
  func.func @transform_2(%arg0: i32, %arg1: i32) -> (i32, i32, i32) {
    %c0_i32 = arith.constant 0 : i32
    %c0_i32_0 = arith.constant 0 : i32
    return %arg0, %arg1, %c0_i32 : i32, i32, i32
  }
  func.func @transform_3(%arg0: i32, %arg1: i32) -> (i32, i32) {
    %c0_i32 = arith.constant 0 : i32
    %c0_i32_0 = arith.constant 0 : i32
    %c0_i32_1 = arith.constant 0 : i32
    return %c0_i32, %c0_i32_0 : i32, i32
  }
  func.func @transform_4(%arg0: i32, %arg1: i32) -> (i32, i32) {
    %c0_i32 = arith.constant 0 : i32
    %c0_i32_0 = arith.constant 0 : i32
    %c0_i32_1 = arith.constant 0 : i32
    return %c0_i32, %c0_i32_0 : i32, i32
  }
  func.func @transform_5(%arg0: i32, %arg1: i32) -> (i32, i32) {
    %c0_i32 = arith.constant 0 : i32
    %c0_i32_0 = arith.constant 0 : i32
    %c0_i32_1 = arith.constant 0 : i32
    return %c0_i32, %c0_i32_0 : i32, i32
  }
  func.func @transform_6(%arg0: i32, %arg1: i32) -> (i32, i32) {
    %c0_i32 = arith.constant 0 : i32
    %c0_i32_0 = arith.constant 0 : i32
    %c0_i32_1 = arith.constant 0 : i32
    return %c0_i32, %c0_i32_0 : i32, i32
  }
  func.func @transform_7(%arg0: i32, %arg1: i32) -> (i32, i32, i32) {
    %c0_i32 = arith.constant 0 : i32
    %c0_i32_0 = arith.constant 0 : i32
    %c0_i32_1 = arith.constant 0 : i32
    return %arg0, %c0_i32, %c0_i32_0 : i32, i32, i32
  }
}

module attributes {stable_mosaic.version = 11 : i64} {
  func.func @_head_kernel(%arg0: memref<8x128xf32, #tpu.memory_space<vmem>>, %arg1: memref<8x128xf32, #tpu.memory_space<vmem>>, %arg2: memref<128x128xf32, #tpu.memory_space<vmem>>, %arg3: memref<1x128xf32, #tpu.memory_space<vmem>>, %arg4: memref<128x128xf32, #tpu.memory_space<vmem>>, %arg5: memref<128x128xf32, #tpu.memory_space<vmem>>, %arg6: memref<1x128xf32, #tpu.memory_space<vmem>>, %arg7: memref<128x128xf32, #tpu.memory_space<vmem>>, %arg8: memref<1x128xf32, #tpu.memory_space<vmem>>, %arg9: memref<8x128xf32, #tpu.memory_space<vmem>>) attributes {dimension_semantics = [], scalar_prefetch = 0 : i64, scratch_operands = 0 : i64, tpu.core_type = #tpu.core_type<tc>} {
    %c0 = arith.constant 0 : index
    %c0_0 = arith.constant 0 : index
    %0 = vector.load %arg1[%c0, %c0_0] : memref<8x128xf32, #tpu.memory_space<vmem>>, vector<8x128xf32>
    %c0_1 = arith.constant 0 : index
    %c0_2 = arith.constant 0 : index
    %1 = vector.load %arg2[%c0_1, %c0_2] : memref<128x128xf32, #tpu.memory_space<vmem>>, vector<128x128xf32>
    %cst = arith.constant dense<0.000000e+00> : vector<8x128xf32>
    %2 = tpu.matmul %0, %1, %cst {dimension_numbers = #tpu.dot_dimension_numbers<[1], [0], [0], [1], [0, 0, 1, 1], [], []>} : vector<8x128xf32>, vector<128x128xf32>, vector<8x128xf32> -> vector<8x128xf32>
    %c0_3 = arith.constant 0 : index
    %c0_4 = arith.constant 0 : index
    %3 = vector.load %arg3[%c0_3, %c0_4] : memref<1x128xf32, #tpu.memory_space<vmem>>, vector<1x128xf32>
    %4 = vector.broadcast %3 : vector<1x128xf32> to vector<8x128xf32>
    %5 = arith.addf %2, %4 : vector<8x128xf32>
    %c0_5 = arith.constant 0 : index
    %c0_6 = arith.constant 0 : index
    %6 = vector.load %arg0[%c0_5, %c0_6] : memref<8x128xf32, #tpu.memory_space<vmem>>, vector<8x128xf32>
    %c0_7 = arith.constant 0 : index
    %c0_8 = arith.constant 0 : index
    %7 = vector.load %arg4[%c0_7, %c0_8] : memref<128x128xf32, #tpu.memory_space<vmem>>, vector<128x128xf32>
    %cst_9 = arith.constant dense<0.000000e+00> : vector<8x128xf32>
    %8 = tpu.matmul %6, %7, %cst_9 {dimension_numbers = #tpu.dot_dimension_numbers<[1], [0], [0], [1], [0, 0, 1, 1], [], []>} : vector<8x128xf32>, vector<128x128xf32>, vector<8x128xf32> -> vector<8x128xf32>
    %c0_10 = arith.constant 0 : index
    %c0_11 = arith.constant 0 : index
    %9 = vector.load %arg5[%c0_10, %c0_11] : memref<128x128xf32, #tpu.memory_space<vmem>>, vector<128x128xf32>
    %cst_12 = arith.constant dense<0.000000e+00> : vector<8x128xf32>
    %10 = tpu.matmul %5, %9, %cst_12 {dimension_numbers = #tpu.dot_dimension_numbers<[1], [0], [0], [1], [0, 0, 1, 1], [], []>} : vector<8x128xf32>, vector<128x128xf32>, vector<8x128xf32> -> vector<8x128xf32>
    %11 = arith.addf %8, %10 : vector<8x128xf32>
    %c0_13 = arith.constant 0 : index
    %c0_14 = arith.constant 0 : index
    %12 = vector.load %arg6[%c0_13, %c0_14] : memref<1x128xf32, #tpu.memory_space<vmem>>, vector<1x128xf32>
    %13 = vector.broadcast %12 : vector<1x128xf32> to vector<8x128xf32>
    %14 = arith.addf %11, %13 : vector<8x128xf32>
    %cst_15 = arith.constant 0.000000e+00 : f32
    %15 = vector.broadcast %cst_15 : f32 to vector<8x128xf32>
    %16 = arith.maximumf %14, %15 : vector<8x128xf32>
    %c0_16 = arith.constant 0 : index
    %c0_17 = arith.constant 0 : index
    %17 = vector.load %arg7[%c0_16, %c0_17] : memref<128x128xf32, #tpu.memory_space<vmem>>, vector<128x128xf32>
    %cst_18 = arith.constant dense<0.000000e+00> : vector<8x128xf32>
    %18 = tpu.matmul %16, %17, %cst_18 {dimension_numbers = #tpu.dot_dimension_numbers<[1], [0], [0], [1], [0, 0, 1, 1], [], []>} : vector<8x128xf32>, vector<128x128xf32>, vector<8x128xf32> -> vector<8x128xf32>
    %c0_19 = arith.constant 0 : index
    %c0_20 = arith.constant 0 : index
    %19 = vector.load %arg8[%c0_19, %c0_20] : memref<1x128xf32, #tpu.memory_space<vmem>>, vector<1x128xf32>
    %20 = vector.broadcast %19 : vector<1x128xf32> to vector<8x128xf32>
    %21 = arith.addf %18, %20 : vector<8x128xf32>
    %c0_21 = arith.constant 0 : index
    %c0_22 = arith.constant 0 : index
    %22 = vector.load %arg9[%c0_21, %c0_22] : memref<8x128xf32, #tpu.memory_space<vmem>>, vector<8x128xf32>
    tpu.vector_store %arg9[%c0_21, %c0_22], %21 {strides = array<i32>} : memref<8x128xf32, #tpu.memory_space<vmem>>, vector<8x128xf32>,
    return
  }
}

</mosaic_0001>

<llo_original>
// kernel: encoder_classifier_mamba_forward.3
$region0: #{encoder_classifier_mamba_forward.3}
  #allocation0 [shape = 'u32[]', space=smem, size = 0x4, offset = 0x4, fixed_abs, tag = 'smem constant byte address 0x4 - core index']
  #allocation1 [shape = 'u32[144,128]{1,0:T(1,128)}', space=vmem, size = 0x12000, scoped, tag = 'internal scratch']
  %s0 = inlined_call_operand.vmem [shape: f32[8,128], index: 0, kind: input, shape index: {}]
  %s1 = inlined_call_operand.vmem [shape: f32[8,128], index: 1, kind: input, shape index: {}]
  %s2 = inlined_call_operand.vmem [shape: f32[128,128], index: 2, kind: input, shape index: {}]
  %s3 = inlined_call_operand.vmem [shape: f32[1,128], index: 3, kind: input, shape index: {}]
  %s4 = inlined_call_operand.vmem [shape: f32[128,128], index: 4, kind: input, shape index: {}]
  %s5 = inlined_call_operand.vmem [shape: f32[128,128], index: 5, kind: input, shape index: {}]
  %s6 = inlined_call_operand.vmem [shape: f32[1,128], index: 6, kind: input, shape index: {}]
  %s7 = inlined_call_operand.vmem [shape: f32[128,128], index: 7, kind: input, shape index: {}]
  %s8 = inlined_call_operand.vmem [shape: f32[1,128], index: 8, kind: input, shape index: {}]
  %s9 = inlined_call_operand.vmem [shape: f32[8,128], index: 9, kind: output, shape index: {}]
  %s10 = sld [smem:[#allocation0]]
  $region46: #{encoder_classifier_mamba_forward.3} parent=0
    _
  %s12 = ssub.s32 1, %s10
  %s13 = scalar_select 0, %s12, %s10
  // Predicated region
  $region2: #{encoder_classifier_mamba_forward.3} parent=0 // pred_check
    _
  $region3: #{encoder_classifier_mamba_forward.3} parent=0 // pred_check_branch
    %15 = sbr.rel (0) target = $region5
  $region4: #{encoder_classifier_mamba_forward.3} parent=0 // pred_region
    _
  $region5: #{encoder_classifier_mamba_forward.3} parent=0 // pred_fallthru
    _
  // Predicated region
  $region6: #{encoder_classifier_mamba_forward.3} parent=0 // pred_check
    _
  $region7: #{encoder_classifier_mamba_forward.3} parent=0 // pred_check_branch
    %17 = sbr.rel (0) target = $region9
  $region8: #{encoder_classifier_mamba_forward.3} parent=0 // pred_region
    _
  $region9: #{encoder_classifier_mamba_forward.3} parent=0 // pred_fallthru
    _
  // Predicated region
  $region10: #{encoder_classifier_mamba_forward.3} parent=0 // pred_check
    _
  $region11: #{encoder_classifier_mamba_forward.3} parent=0 // pred_check_branch
    %19 = sbr.rel (0) target = $region13
  $region12: #{encoder_classifier_mamba_forward.3} parent=0 // pred_region
    _
  $region13: #{encoder_classifier_mamba_forward.3} parent=0 // pred_fallthru
    _
  // Predicated region
  $region14: #{encoder_classifier_mamba_forward.3} parent=0 // pred_check
    _
  $region15: #{encoder_classifier_mamba_forward.3} parent=0 // pred_check_branch
    %21 = sbr.rel (0) target = $region17
  $region16: #{encoder_classifier_mamba_forward.3} parent=0 // pred_region
    _
  $region17: #{encoder_classifier_mamba_forward.3} parent=0 // pred_fallthru
    _
  // Predicated region
  $region18: #{encoder_classifier_mamba_forward.3} parent=0 // pred_check
    _
  $region19: #{encoder_classifier_mamba_forward.3} parent=0 // pred_check_branch
    %23 = sbr.rel (0) target = $region21
  $region20: #{encoder_classifier_mamba_forward.3} parent=0 // pred_region
    _
  $region21: #{encoder_classifier_mamba_forward.3} parent=0 // pred_fallthru
    _
  // Predicated region
  $region22: #{encoder_classifier_mamba_forward.3} parent=0 // pred_check
    _
  $region23: #{encoder_classifier_mamba_forward.3} parent=0 // pred_check_branch
    %25 = sbr.rel (0) target = $region25
  $region24: #{encoder_classifier_mamba_forward.3} parent=0 // pred_region
    _
  $region25: #{encoder_classifier_mamba_forward.3} parent=0 // pred_fallthru
    _
  // Predicated region
  $region26: #{encoder_classifier_mamba_forward.3} parent=0 // pred_check
    _
  $region27: #{encoder_classifier_mamba_forward.3} parent=0 // pred_check_branch
    %27 = sbr.rel (0) target = $region29
  $region28: #{encoder_classifier_mamba_forward.3} parent=0 // pred_region
    _
  $region29: #{encoder_classifier_mamba_forward.3} parent=0 // pred_fallthru
    _
  // Predicated region
  $region30: #{encoder_classifier_mamba_forward.3} parent=0 // pred_check
    _
  $region31: #{encoder_classifier_mamba_forward.3} parent=0 // pred_check_branch
    %29 = sbr.rel (0) target = $region33
  $region32: #{encoder_classifier_mamba_forward.3} parent=0 // pred_region
    _
  $region33: #{encoder_classifier_mamba_forward.3} parent=0 // pred_fallthru
    _
  // Predicated region
  $region34: #{encoder_classifier_mamba_forward.3} parent=0 // pred_check
    _
  $region35: #{encoder_classifier_mamba_forward.3} parent=0 // pred_check_branch
    %31 = sbr.rel (0) target = $region37
  $region36: #{encoder_classifier_mamba_forward.3} parent=0 // pred_region
    _
  $region37: #{encoder_classifier_mamba_forward.3} parent=0 // pred_fallthru
    _
  %v32 = vld [vmem:[%s1] sm:$0xff]
  %v33 = vld [vmem:[%s2] sm:$0xff]
  %v34 = vld [vmem:[%s2 + $0x8] sm:$0xff]
  %v35 = vld [vmem:[%s2 + $0x10] sm:$0xff]
  %v36 = vld [vmem:[%s2 + $0x18] sm:$0xff]
  %v37 = vld [vmem:[%s2 + $0x20] sm:$0xff]
  %v38 = vld [vmem:[%s2 + $0x28] sm:$0xff]
  %v39 = vld [vmem:[%s2 + $0x30] sm:$0xff]
  %v40 = vld [vmem:[%s2 + $0x38] sm:$0xff]
  %v41 = vld [vmem:[%s2 + $0x40] sm:$0xff]
  %v42 = vld [vmem:[%s2 + $0x48] sm:$0xff]
  %v43 = vld [vmem:[%s2 + $0x50] sm:$0xff]
  %v44 = vld [vmem:[%s2 + $0x58] sm:$0xff]
  %v45 = vld [vmem:[%s2 + $0x60] sm:$0xff]
  %v46 = vld [vmem:[%s2 + $0x68] sm:$0xff]
  %v47 = vld [vmem:[%s2 + $0x70] sm:$0xff]
  %v48 = vld [vmem:[%s2 + $0x78] sm:$0xff]
  %v49 = vld [vmem:[%s3] sm:$0x1]
  %v51 = vlaneseq
  %v52 = vshrl.u32 %v51, 7
  %v53 = vsub.s32 0, %v52
  %v54 = vrot.slane %v49, %v53
  %56 = vmatprep.subr.mxu0 0.0
  %57 = vmatpush1.msra.mxu0 %v48
  %58 = vmatprep.subr.mxu0 0.0
  %59 = vmatpush1.msra.mxu0 %v47
  %60 = vmatprep.subr.mxu0 0.0
  %61 = vmatpush1.msra.mxu0 %v46
  %62 = vmatprep.subr.mxu0 0.0
  %63 = vmatpush1.msra.mxu0 %v45
  %64 = vmatprep.subr.mxu0 0.0
  %65 = vmatpush1.msra.mxu0 %v44
  %66 = vmatprep.subr.mxu0 0.0
  %67 = vmatpush1.msra.mxu0 %v43
  %68 = vmatprep.subr.mxu0 0.0
  %69 = vmatpush1.msra.mxu0 %v42
  %70 = vmatprep.subr.mxu0 0.0
  %71 = vmatpush1.msra.mxu0 %v41
  %72 = vmatprep.subr.mxu0 0.0
  %73 = vmatpush1.msra.mxu0 %v40
  %74 = vmatprep.subr.mxu0 0.0
  %75 = vmatpush1.msra.mxu0 %v39
  %76 = vmatprep.subr.mxu0 0.0
  %77 = vmatpush1.msra.mxu0 %v38
  %78 = vmatprep.subr.mxu0 0.0
  %79 = vmatpush1.msra.mxu0 %v37
  %80 = vmatprep.subr.mxu0 0.0
  %81 = vmatpush1.msra.mxu0 %v36
  %82 = vmatprep.subr.mxu0 0.0
  %83 = vmatpush1.msra.mxu0 %v35
  %84 = vmatprep.subr.mxu0 0.0
  %85 = vmatpush1.msra.mxu0 %v34
  %86 = vmatprep.subr.mxu0 0.0
  %87 = vmatpush1.msra.mxu0 %v33
  %88 = vmatprep.subr.mxu0 0.0
  %89 = vmatpush2.msra.mxu0 0.0
  %90 = vmatprep.subr.mxu0 0.0
  %91 = vmatpush2.msra.mxu0 0.0
  %92 = vmatprep.subr.mxu0 0.0
  %93 = vmatpush2.msra.mxu0 0.0
  %94 = vmatprep.subr.mxu0 0.0
  %95 = vmatpush2.msra.mxu0 0.0
  %96 = vmatprep.subr.mxu0 0.0
  %97 = vmatpush2.msra.mxu0 0.0
  %98 = vmatprep.subr.mxu0 0.0
  %99 = vmatpush2.msra.mxu0 0.0
  %100 = vmatprep.subr.mxu0 0.0
  %101 = vmatpush2.msra.mxu0 0.0
  %102 = vmatprep.subr.mxu0 0.0
  %103 = vmatpush2.msra.mxu0 0.0
  %104 = vmatprep.subr.mxu0 0.0
  %105 = vmatpush2.msra.mxu0 0.0
  %106 = vmatprep.subr.mxu0 0.0
  %107 = vmatpush2.msra.mxu0 0.0
  %108 = vmatprep.subr.mxu0 0.0
  %109 = vmatpush2.msra.mxu0 0.0
  %110 = vmatprep.subr.mxu0 0.0
  %111 = vmatpush2.msra.mxu0 0.0
  %112 = vmatprep.subr.mxu0 0.0
  %113 = vmatpush2.msra.mxu0 0.0
  %114 = vmatprep.subr.mxu0 0.0
  %115 = vmatpush2.msra.mxu0 0.0
  %116 = vmatprep.subr.mxu0 0.0
  %117 = vmatpush2.msra.mxu0 0.0
  %118 = vmatprep.subr.mxu0 0.0
  %119 = vmatpush2.msra.mxu0 0.0
  %120 = vmatprep.mubr.f32.mxu0 0.0
  %121 = vmatmul.mubr.f32.gmra.mxu0 %v32
  %v122 = vpop.f32.mrf.mxu0
  %v123 = vadd.f32 %v54, %v122
  %v124 = vpop.f32.mrf.mxu0
  %125 = vdwg.mxu0
  %v126 = vld [vmem:[%s0] sm:$0xff]
  %v127 = vld [vmem:[%s4] sm:$0xff]
  %v128 = vld [vmem:[%s4 + $0x8] sm:$0xff]
  %v129 = vld [vmem:[%s4 + $0x10] sm:$0xff]
  %v130 = vld [vmem:[%s4 + $0x18] sm:$0xff]
  %v131 = vld [vmem:[%s4 + $0x20] sm:$0xff]
  %v132 = vld [vmem:[%s4 + $0x28] sm:$0xff]
  %v133 = vld [vmem:[%s4 + $0x30] sm:$0xff]
  %v134 = vld [vmem:[%s4 + $0x38] sm:$0xff]
  %v135 = vld [vmem:[%s4 + $0x40] sm:$0xff]
  %v136 = vld [vmem:[%s4 + $0x48] sm:$0xff]
  %v137 = vld [vmem:[%s4 + $0x50] sm:$0xff]
  %v138 = vld [vmem:[%s4 + $0x58] sm:$0xff]
  %v139 = vld [vmem:[%s4 + $0x60] sm:$0xff]
  %v140 = vld [vmem:[%s4 + $0x68] sm:$0xff]
  %v141 = vld [vmem:[%s4 + $0x70] sm:$0xff]
  %v142 = vld [vmem:[%s4 + $0x78] sm:$0xff]
  %v143 = vld [vmem:[%s5] sm:$0xff]
  %v144 = vld [vmem:[%s5 + $0x8] sm:$0xff]
  %v145 = vld [vmem:[%s5 + $0x10] sm:$0xff]
  %v146 = vld [vmem:[%s5 + $0x18] sm:$0xff]
  %v147 = vld [vmem:[%s5 + $0x20] sm:$0xff]
  %v148 = vld [vmem:[%s5 + $0x28] sm:$0xff]
  %v149 = vld [vmem:[%s5 + $0x30] sm:$0xff]
  %v150 = vld [vmem:[%s5 + $0x38] sm:$0xff]
  %v151 = vld [vmem:[%s5 + $0x40] sm:$0xff]
  %v152 = vld [vmem:[%s5 + $0x48] sm:$0xff]
  %v153 = vld [vmem:[%s5 + $0x50] sm:$0xff]
  %v154 = vld [vmem:[%s5 + $0x58] sm:$0xff]
  %v155 = vld [vmem:[%s5 + $0x60] sm:$0xff]
  %v156 = vld [vmem:[%s5 + $0x68] sm:$0xff]
  %v157 = vld [vmem:[%s5 + $0x70] sm:$0xff]
  %v158 = vld [vmem:[%s5 + $0x78] sm:$0xff]
  %159 = vmatprep.subr.mxu0 0.0
  %160 = vmatpush1.msra.mxu0 %v158
  %161 = vmatprep.subr.mxu0 0.0
  %162 = vmatpush1.msra.mxu0 %v157
  %163 = vmatprep.subr.mxu0 0.0
  %164 = vmatpush1.msra.mxu0 %v156
  %165 = vmatprep.subr.mxu0 0.0
  %166 = vmatpush1.msra.mxu0 %v155
  %167 = vmatprep.subr.mxu0 0.0
  %168 = vmatpush1.msra.mxu0 %v154
  %169 = vmatprep.subr.mxu0 0.0
  %170 = vmatpush1.msra.mxu0 %v153
  %171 = vmatprep.subr.mxu0 0.0
  %172 = vmatpush1.msra.mxu0 %v152
  %173 = vmatprep.subr.mxu0 0.0
  %174 = vmatpush1.msra.mxu0 %v151
  %175 = vmatprep.subr.mxu0 0.0
  %176 = vmatpush1.msra.mxu0 %v150
  %177 = vmatprep.subr.mxu0 0.0
  %178 = vmatpush1.msra.mxu0 %v149
  %179 = vmatprep.subr.mxu0 0.0
  %180 = vmatpush1.msra.mxu0 %v148
  %181 = vmatprep.subr.mxu0 0.0
  %182 = vmatpush1.msra.mxu0 %v147
  %183 = vmatprep.subr.mxu0 0.0
  %184 = vmatpush1.msra.mxu0 %v146
  %185 = vmatprep.subr.mxu0 0.0
  %186 = vmatpush1.msra.mxu0 %v145
  %187 = vmatprep.subr.mxu0 0.0
  %188 = vmatpush1.msra.mxu0 %v144
  %189 = vmatprep.subr.mxu0 0.0
  %190 = vmatpush1.msra.mxu0 %v143
  %191 = vmatprep.subr.mxu0 0.0
  %192 = vmatpush2.msra.mxu0 0.0
  %193 = vmatprep.subr.mxu0 0.0
  %194 = vmatpush2.msra.mxu0 0.0
  %195 = vmatprep.subr.mxu0 0.0
  %196 = vmatpush2.msra.mxu0 0.0
  %197 = vmatprep.subr.mxu0 0.0
  %198 = vmatpush2.msra.mxu0 0.0
  %199 = vmatprep.subr.mxu0 0.0
  %200 = vmatpush2.msra.mxu0 0.0
  %201 = vmatprep.subr.mxu0 0.0
  %202 = vmatpush2.msra.mxu0 0.0
  %203 = vmatprep.subr.mxu0 0.0
  %204 = vmatpush2.msra.mxu0 0.0
  %205 = vmatprep.subr.mxu0 0.0
  %206 = vmatpush2.msra.mxu0 0.0
  %207 = vmatprep.subr.mxu0 0.0
  %208 = vmatpush2.msra.mxu0 0.0
  %209 = vmatprep.subr.mxu0 0.0
  %210 = vmatpush2.msra.mxu0 0.0
  %211 = vmatprep.subr.mxu0 0.0
  %212 = vmatpush2.msra.mxu0 0.0
  %213 = vmatprep.subr.mxu0 0.0
  %214 = vmatpush2.msra.mxu0 0.0
  %215 = vmatprep.subr.mxu0 0.0
  %216 = vmatpush2.msra.mxu0 0.0
  %217 = vmatprep.subr.mxu0 0.0
  %218 = vmatpush2.msra.mxu0 0.0
  %219 = vmatprep.subr.mxu0 0.0
  %220 = vmatpush2.msra.mxu0 0.0
  %221 = vmatprep.subr.mxu0 0.0
  %222 = vmatpush2.msra.mxu0 0.0
  %223 = vmatprep.mubr.f32.mxu0 0.0
  %224 = vmatmul.mubr.f32.gmra.mxu0 %v123
  %v225 = vpop.f32.mrf.mxu0
  %v226 = vadd.f32 0.0, %v225
  %v227 = vpop.f32.mrf.mxu0
  %228 = vdwg.mxu0
  %229 = vmatprep.subr.mxu0 0.0
  %230 = vmatpush1.msra.mxu0 %v142
  %231 = vmatprep.subr.mxu0 0.0
  %232 = vmatpush1.msra.mxu0 %v141
  %233 = vmatprep.subr.mxu0 0.0
  %234 = vmatpush1.msra.mxu0 %v140
  %235 = vmatprep.subr.mxu0 0.0
  %236 = vmatpush1.msra.mxu0 %v139
  %237 = vmatprep.subr.mxu0 0.0
  %238 = vmatpush1.msra.mxu0 %v138
  %239 = vmatprep.subr.mxu0 0.0
  %240 = vmatpush1.msra.mxu0 %v137
  %241 = vmatprep.subr.mxu0 0.0
  %242 = vmatpush1.msra.mxu0 %v136
  %243 = vmatprep.subr.mxu0 0.0
  %244 = vmatpush1.msra.mxu0 %v135
  %245 = vmatprep.subr.mxu0 0.0
  %246 = vmatpush1.msra.mxu0 %v134
  %247 = vmatprep.subr.mxu0 0.0
  %248 = vmatpush1.msra.mxu0 %v133
  %249 = vmatprep.subr.mxu0 0.0
  %250 = vmatpush1.msra.mxu0 %v132
  %251 = vmatprep.subr.mxu0 0.0
  %252 = vmatpush1.msra.mxu0 %v131
  %253 = vmatprep.subr.mxu0 0.0
  %254 = vmatpush1.msra.mxu0 %v130
  %255 = vmatprep.subr.mxu0 0.0
  %256 = vmatpush1.msra.mxu0 %v129
  %257 = vmatprep.subr.mxu0 0.0
  %258 = vmatpush1.msra.mxu0 %v128
  %259 = vmatprep.subr.mxu0 0.0
  %260 = vmatpush1.msra.mxu0 %v127
  %261 = vmatprep.subr.mxu0 0.0
  %262 = vmatpush2.msra.mxu0 0.0
  %263 = vmatprep.subr.mxu0 0.0
  %264 = vmatpush2.msra.mxu0 0.0
  %265 = vmatprep.subr.mxu0 0.0
  %266 = vmatpush2.msra.mxu0 0.0
  %267 = vmatprep.subr.mxu0 0.0
  %268 = vmatpush2.msra.mxu0 0.0
  %269 = vmatprep.subr.mxu0 0.0
  %270 = vmatpush2.msra.mxu0 0.0
  %271 = vmatprep.subr.mxu0 0.0
  %272 = vmatpush2.msra.mxu0 0.0
  %273 = vmatprep.subr.mxu0 0.0
  %274 = vmatpush2.msra.mxu0 0.0
  %275 = vmatprep.subr.mxu0 0.0
  %276 = vmatpush2.msra.mxu0 0.0
  %277 = vmatprep.subr.mxu0 0.0
  %278 = vmatpush2.msra.mxu0 0.0
  %279 = vmatprep.subr.mxu0 0.0
  %280 = vmatpush2.msra.mxu0 0.0
  %281 = vmatprep.subr.mxu0 0.0
  %282 = vmatpush2.msra.mxu0 0.0
  %283 = vmatprep.subr.mxu0 0.0
  %284 = vmatpush2.msra.mxu0 0.0
  %285 = vmatprep.subr.mxu0 0.0
  %286 = vmatpush2.msra.mxu0 0.0
  %287 = vmatprep.subr.mxu0 0.0
  %288 = vmatpush2.msra.mxu0 0.0
  %289 = vmatprep.subr.mxu0 0.0
  %290 = vmatpush2.msra.mxu0 0.0
  %291 = vmatprep.subr.mxu0 0.0
  %292 = vmatpush2.msra.mxu0 0.0
  %293 = vmatprep.mubr.f32.mxu0 0.0
  %294 = vmatmul.mubr.f32.gmra.mxu0 %v126
  %v295 = vpop.f32.mrf.mxu0
  %v296 = vadd.f32 %v226, %v295
  %v297 = vpop.f32.mrf.mxu0
  %298 = vdwg.mxu0
  %v299 = vld [vmem:[%s6] sm:$0x1]
  %v301 = vlaneseq
  %v302 = vshrl.u32 %v301, 7
  %v303 = vsub.s32 0, %v302
  %v304 = vrot.slane %v299, %v303
  %v306 = vadd.f32 %v296, %v304
  %v307 = vmax.f32 %v306, 0.0
  %v308 = vld [vmem:[%s7] sm:$0xff]
  %v309 = vld [vmem:[%s7 + $0x8] sm:$0xff]
  %v310 = vld [vmem:[%s7 + $0x10] sm:$0xff]
  %v311 = vld [vmem:[%s7 + $0x18] sm:$0xff]
  %v312 = vld [vmem:[%s7 + $0x20] sm:$0xff]
  %v313 = vld [vmem:[%s7 + $0x28] sm:$0xff]
  %v314 = vld [vmem:[%s7 + $0x30] sm:$0xff]
  %v315 = vld [vmem:[%s7 + $0x38] sm:$0xff]
  %v316 = vld [vmem:[%s7 + $0x40] sm:$0xff]
  %v317 = vld [vmem:[%s7 + $0x48] sm:$0xff]
  %v318 = vld [vmem:[%s7 + $0x50] sm:$0xff]
  %v319 = vld [vmem:[%s7 + $0x58] sm:$0xff]
  %v320 = vld [vmem:[%s7 + $0x60] sm:$0xff]
  %v321 = vld [vmem:[%s7 + $0x68] sm:$0xff]
  %v322 = vld [vmem:[%s7 + $0x70] sm:$0xff]
  %v323 = vld [vmem:[%s7 + $0x78] sm:$0xff]
  %v324 = vld [vmem:[%s8] sm:$0x1]
  %v326 = vlaneseq
  %v327 = vshrl.u32 %v326, 7
  %v328 = vsub.s32 0, %v327
  %v329 = vrot.slane %v324, %v328
  %331 = vmatprep.subr.mxu0 0.0
  %332 = vmatpush1.msra.mxu0 %v323
  %333 = vmatprep.subr.mxu0 0.0
  %334 = vmatpush1.msra.mxu0 %v322
  %335 = vmatprep.subr.mxu0 0.0
  %336 = vmatpush1.msra.mxu0 %v321
  %337 = vmatprep.subr.mxu0 0.0
  %338 = vmatpush1.msra.mxu0 %v320
  %339 = vmatprep.subr.mxu0 0.0
  %340 = vmatpush1.msra.mxu0 %v319
  %341 = vmatprep.subr.mxu0 0.0
  %342 = vmatpush1.msra.mxu0 %v318
  %343 = vmatprep.subr.mxu0 0.0
  %344 = vmatpush1.msra.mxu0 %v317
  %345 = vmatprep.subr.mxu0 0.0
  %346 = vmatpush1.msra.mxu0 %v316
  %347 = vmatprep.subr.mxu0 0.0
  %348 = vmatpush1.msra.mxu0 %v315
  %349 = vmatprep.subr.mxu0 0.0
  %350 = vmatpush1.msra.mxu0 %v314
  %351 = vmatprep.subr.mxu0 0.0
  %352 = vmatpush1.msra.mxu0 %v313
  %353 = vmatprep.subr.mxu0 0.0
  %354 = vmatpush1.msra.mxu0 %v312
  %355 = vmatprep.subr.mxu0 0.0
  %356 = vmatpush1.msra.mxu0 %v311
  %357 = vmatprep.subr.mxu0 0.0
  %358 = vmatpush1.msra.mxu0 %v310
  %359 = vmatprep.subr.mxu0 0.0
  %360 = vmatpush1.msra.mxu0 %v309
  %361 = vmatprep.subr.mxu0 0.0
  %362 = vmatpush1.msra.mxu0 %v308
  %363 = vmatprep.subr.mxu0 0.0
  %364 = vmatpush2.msra.mxu0 0.0
  %365 = vmatprep.subr.mxu0 0.0
  %366 = vmatpush2.msra.mxu0 0.0
  %367 = vmatprep.subr.mxu0 0.0
  %368 = vmatpush2.msra.mxu0 0.0
  %369 = vmatprep.subr.mxu0 0.0
  %370 = vmatpush2.msra.mxu0 0.0
  %371 = vmatprep.subr.mxu0 0.0
  %372 = vmatpush2.msra.mxu0 0.0
  %373 = vmatprep.subr.mxu0 0.0
  %374 = vmatpush2.msra.mxu0 0.0
  %375 = vmatprep.subr.mxu0 0.0
  %376 = vmatpush2.msra.mxu0 0.0
  %377 = vmatprep.subr.mxu0 0.0
  %378 = vmatpush2.msra.mxu0 0.0
  %379 = vmatprep.subr.mxu0 0.0
  %380 = vmatpush2.msra.mxu0 0.0
  %381 = vmatprep.subr.mxu0 0.0
  %382 = vmatpush2.msra.mxu0 0.0
  %383 = vmatprep.subr.mxu0 0.0
  %384 = vmatpush2.msra.mxu0 0.0
  %385 = vmatprep.subr.mxu0 0.0
  %386 = vmatpush2.msra.mxu0 0.0
  %387 = vmatprep.subr.mxu0 0.0
  %388 = vmatpush2.msra.mxu0 0.0
  %389 = vmatprep.subr.mxu0 0.0
  %390 = vmatpush2.msra.mxu0 0.0
  %391 = vmatprep.subr.mxu0 0.0
  %392 = vmatpush2.msra.mxu0 0.0
  %393 = vmatprep.subr.mxu0 0.0
  %394 = vmatpush2.msra.mxu0 0.0
  %395 = vmatprep.mubr.f32.mxu0 0.0
  %396 = vmatmul.mubr.f32.gmra.mxu0 %v307
  %v397 = vpop.f32.mrf.mxu0
  %v398 = vadd.f32 %v329, %v397
  %v399 = vpop.f32.mrf.mxu0
  %400 = vdwg.mxu0
  %401 = vst [vmem:[%s9] sm:$0xff] %v398
  // Predicated region
  $region38: #{encoder_classifier_mamba_forward.3} parent=0 // pred_check
    _
  $region39: #{encoder_classifier_mamba_forward.3} parent=0 // pred_check_branch
    %403 = sbr.rel (0) target = $region41
  $region40: #{encoder_classifier_mamba_forward.3} parent=0 // pred_region
    _
  $region41: #{encoder_classifier_mamba_forward.3} parent=0 // pred_fallthru
    _
  // Predicated region
  $region42: #{encoder_classifier_mamba_forward.3} parent=0 // pred_check
    _
  $region43: #{encoder_classifier_mamba_forward.3} parent=0 // pred_check_branch
    %405 = sbr.rel (0) target = $region45
  $region44: #{encoder_classifier_mamba_forward.3} parent=0 // pred_region
    _
  $region45: #{encoder_classifier_mamba_forward.3} parent=0 // pred_fallthru
    _

// kernel: encoder_classifier_mamba_forward.2
$region0: #{encoder_classifier_mamba_forward.2}
  #allocation0 [shape = 'u32[]', space=smem, size = 0x4, offset = 0x4, fixed_abs, tag = 'smem constant byte address 0x4 - core index']
  #allocation1 [shape = 'u32[144,128]{1,0:T(1,128)}', space=vmem, size = 0x12000, scoped, tag = 'internal scratch']
  #allocation2 [shape = 'f32[1,128]{1,0:T(1,128)}', space=vmem, size = 0x200, scoped, tag = 'scratch operand']
  #allocation3 [shape = 'f32[1,1]{1,0:T(1,128)}', space=vmem, size = 0x200, scoped, tag = 'scratch operand']
  %s0 = inlined_call_operand.vmem [shape: f32[2,16,8], index: 0, kind: input, shape index: {}]
  %s1 = inlined_call_operand.vmem [shape: f32[2,16,8], index: 1, kind: input, shape index: {}]
  %s2 = inlined_call_operand.vmem [shape: f32[2,16,1], index: 2, kind: input, shape index: {}]
  %s3 = inlined_call_operand.vmem [shape: f32[8,128], index: 3, kind: input, shape index: {}]
  %s4 = inlined_call_operand.vmem [shape: f32[8,128], index: 4, kind: input, shape index: {}]
  %s5 = inlined_call_operand.vmem [shape: f32[1,128], index: 5, kind: input, shape index: {}]
  %s6 = inlined_call_operand.vmem [shape: f32[1,128], index: 6, kind: input, shape index: {}]
  %s7 = inlined_call_operand.vmem [shape: f32[2,1,128], index: 7, kind: output, shape index: {}]
  %s8 = sld [smem:[#allocation0]]
  $region69: #{encoder_classifier_mamba_forward.2} parent=0
    _
  %s10 = ssub.s32 1, %s8
  %s11 = scalar_select 0, %s10, %s8
  loop: start=0, step=1, limit=4
  $region2: #{encoder_classifier_mamba_forward.2} parent=0 // loop_pre_header
    _
  $region3: #{encoder_classifier_mamba_forward.2} parent=0 // loop_header
    %s13 = sphi 0, %s17
    %p14 = scmp.ge.s32.totalorder %s13, 4
    %s20 = sphi 0, %s32
    %s21 = sphi 0, %s28
    %s22 = sphi 0, %s20
    %s23 = sphi 0, %s21
    %s24 = sphi 0, %s22
    %s25 = sphi 0, %s23
    %s37 = sphi 0, %s39
    %s40 = sphi 0, %s37
    %s41 = sphi 0, %s40
    %s57 = sphi 0, %s41
    %s65 = sphi 0, %s67
    %s68 = sphi 0, %s65
    %s69 = sphi 0, %s68
    %s85 = sphi 0, %s69
    %s93 = sphi 0, %s95
    %s96 = sphi 0, %s93
    %s97 = sphi 0, %s96
    %s113 = sphi 0, %s97
    %s117 = sphi 0, %s117
    %s119 = sphi 0, %s117
    %s120 = sphi 0, %s119
    %s134 = sphi 0, %s120
    %s138 = sphi 0, %s138
    %s140 = sphi 0, %s138
    %s141 = sphi 0, %s140
    %s155 = sphi 0, %s141
    %s159 = sphi 0, %s159
    %s161 = sphi 0, %s159
    %s162 = sphi 0, %s161
    %s176 = sphi 0, %s162
    %s180 = sphi 0, %s180
    %s182 = sphi 0, %s180
    %s183 = sphi 0, %s182
    %s197 = sphi 0, %s183
    %s203 = sphi 0, %s205
    %s206 = sphi 0, %s203
    %s207 = sphi 0, %s206
    %s223 = sphi 0, %s207
  $region4: #{encoder_classifier_mamba_forward.2} parent=0 // loop_header_branch
    %16 = sbr.rel (%p14) target = $region8
  $region5: #{encoder_classifier_mamba_forward.2} parent=0 // loop_body
    %s18 = ssub.s32 %s13, 1
    %s19 = ssub.s32 %s13, 2
    %s26 = sadd.s32 1, %s21
    %p27 = scmp.ge.s32.totalorder %s26, 1
    %s28 = scalar_select %p27, 0, %s26
    %s29 = sadd.s32 1, %s20
    %s30 = scalar_select %p27, %s29, %s20
    %p31 = scmp.ge.s32.totalorder %s30, 2
    %s32 = scalar_select %p31, 0, %s30
    %s33 = ssub.s32 %s20, %s32
    %s34 = ssub.s32 %s21, %s28
    %s35 = sor.u32 %s33, %s34
    %p36 = scmp.eq.s32.totalorder %s35, 0
    %s38 = sadd.s32 %s37, 1
    %s39 = scalar_select %p36, %s37, %s38
    %p42 = pneg %p36
    %p43 = scmp.eq.s32.totalorder %s13, 1
    %p44 = por %p42, %p43
    %p45 = scmp.ne.s32.totalorder %s37, %s40
    %p46 = scmp.eq.s32.totalorder %s13, 0
    %p47 = por %p45, %p46
    %p48 = scmp.ne.s32.totalorder %s37, %s40
    %p49 = scmp.eq.s32.totalorder %s18, 1
    %p50 = por %p48, %p49
    %p51 = scmp.ne.s32.totalorder %s40, %s41
    %p52 = scmp.eq.s32.totalorder %s18, 0
    %p53 = por %p51, %p52
    %p54 = scmp.ne.s32.totalorder %s40, %s41
    %p55 = scmp.eq.s32.totalorder %s19, 1
    %p56 = por %p54, %p55
    %p58 = scmp.ne.s32.totalorder %s41, %s57
    %p59 = scmp.eq.s32.totalorder %s19, 0
    %p60 = por %p58, %p59
    %s61 = ssub.s32 %s20, %s32
    %s62 = ssub.s32 %s21, %s28
    %s63 = sor.u32 %s61, %s62
    %p64 = scmp.eq.s32.totalorder %s63, 0
    %s66 = sadd.s32 %s65, 1
    %s67 = scalar_select %p64, %s65, %s66
    %p70 = pneg %p64
    %p71 = scmp.eq.s32.totalorder %s13, 1
    %p72 = por %p70, %p71
    %p73 = scmp.ne.s32.totalorder %s65, %s68
    %p74 = scmp.eq.s32.totalorder %s13, 0
    %p75 = por %p73, %p74
    %p76 = scmp.ne.s32.totalorder %s65, %s68
    %p77 = scmp.eq.s32.totalorder %s18, 1
    %p78 = por %p76, %p77
    %p79 = scmp.ne.s32.totalorder %s68, %s69
    %p80 = scmp.eq.s32.totalorder %s18, 0
    %p81 = por %p79, %p80
    %p82 = scmp.ne.s32.totalorder %s68, %s69
    %p83 = scmp.eq.s32.totalorder %s19, 1
    %p84 = por %p82, %p83
    %p86 = scmp.ne.s32.totalorder %s69, %s85
    %p87 = scmp.eq.s32.totalorder %s19, 0
    %p88 = por %p86, %p87
    %s89 = ssub.s32 %s20, %s32
    %s90 = ssub.s32 %s21, %s28
    %s91 = sor.u32 %s89, %s90
    %p92 = scmp.eq.s32.totalorder %s91, 0
    %s94 = sadd.s32 %s93, 1
    %s95 = scalar_select %p92, %s93, %s94
    %p98 = pneg %p92
    %p99 = scmp.eq.s32.totalorder %s13, 1
    %p100 = por %p98, %p99
    %p101 = scmp.ne.s32.totalorder %s93, %s96
    %p102 = scmp.eq.s32.totalorder %s13, 0
    %p103 = por %p101, %p102
    %p104 = scmp.ne.s32.totalorder %s93, %s96
    %p105 = scmp.eq.s32.totalorder %s18, 1
    %p106 = por %p104, %p105
    %p107 = scmp.ne.s32.totalorder %s96, %s97
    %p108 = scmp.eq.s32.totalorder %s18, 0
    %p109 = por %p107, %p108
    %p110 = scmp.ne.s32.totalorder %s96, %s97
    %p111 = scmp.eq.s32.totalorder %s19, 1
    %p112 = por %p110, %p111
    %p114 = scmp.ne.s32.totalorder %s97, %s113
    %p115 = scmp.eq.s32.totalorder %s19, 0
    %p116 = por %p114, %p115
    %s118 = sadd.s32 %s117, 1
    %p121 = scmp.eq.s32.totalorder %s13, 1
    %p122 = scmp.ne.s32.totalorder %s117, %s119
    %p123 = scmp.eq.s32.totalorder %s13, 0
    %p124 = por %p122, %p123
    %p125 = scmp.ne.s32.totalorder %s117, %s119
    %p126 = scmp.eq.s32.totalorder %s18, 1
    %p127 = por %p125, %p126
    %p128 = scmp.ne.s32.totalorder %s119, %s120
    %p129 = scmp.eq.s32.totalorder %s18, 0
    %p130 = por %p128, %p129
    %p131 = scmp.ne.s32.totalorder %s119, %s120
    %p132 = scmp.eq.s32.totalorder %s19, 1
    %p133 = por %p131, %p132
    %p135 = scmp.ne.s32.totalorder %s120, %s134
    %p136 = scmp.eq.s32.totalorder %s19, 0
    %p137 = por %p135, %p136
    %s139 = sadd.s32 %s138, 1
    %p142 = scmp.eq.s32.totalorder %s13, 1
    %p143 = scmp.ne.s32.totalorder %s138, %s140
    %p144 = scmp.eq.s32.totalorder %s13, 0
    %p145 = por %p143, %p144
    %p146 = scmp.ne.s32.totalorder %s138, %s140
    %p147 = scmp.eq.s32.totalorder %s18, 1
    %p148 = por %p146, %p147
    %p149 = scmp.ne.s32.totalorder %s140, %s141
    %p150 = scmp.eq.s32.totalorder %s18, 0
    %p151 = por %p149, %p150
    %p152 = scmp.ne.s32.totalorder %s140, %s141
    %p153 = scmp.eq.s32.totalorder %s19, 1
    %p154 = por %p152, %p153
    %p156 = scmp.ne.s32.totalorder %s141, %s155
    %p157 = scmp.eq.s32.totalorder %s19, 0
    %p158 = por %p156, %p157
    %s160 = sadd.s32 %s159, 1
    %p163 = scmp.eq.s32.totalorder %s13, 1
    %p164 = scmp.ne.s32.totalorder %s159, %s161
    %p165 = scmp.eq.s32.totalorder %s13, 0
    %p166 = por %p164, %p165
    %p167 = scmp.ne.s32.totalorder %s159, %s161
    %p168 = scmp.eq.s32.totalorder %s18, 1
    %p169 = por %p167, %p168
    %p170 = scmp.ne.s32.totalorder %s161, %s162
    %p171 = scmp.eq.s32.totalorder %s18, 0
    %p172 = por %p170, %p171
    %p173 = scmp.ne.s32.totalorder %s161, %s162
    %p174 = scmp.eq.s32.totalorder %s19, 1
    %p175 = por %p173, %p174
    %p177 = scmp.ne.s32.totalorder %s162, %s176
    %p178 = scmp.eq.s32.totalorder %s19, 0
    %p179 = por %p177, %p178
    %s181 = sadd.s32 %s180, 1
    %p184 = scmp.eq.s32.totalorder %s13, 1
    %p185 = scmp.ne.s32.totalorder %s180, %s182
    %p186 = scmp.eq.s32.totalorder %s13, 0
    %p187 = por %p185, %p186
    %p188 = scmp.ne.s32.totalorder %s180, %s182
    %p189 = scmp.eq.s32.totalorder %s18, 1
    %p190 = por %p188, %p189
    %p191 = scmp.ne.s32.totalorder %s182, %s183
    %p192 = scmp.eq.s32.totalorder %s18, 0
    %p193 = por %p191, %p192
    %p194 = scmp.ne.s32.totalorder %s182, %s183
    %p195 = scmp.eq.s32.totalorder %s19, 1
    %p196 = por %p194, %p195
    %p198 = scmp.ne.s32.totalorder %s183, %s197
    %p199 = scmp.eq.s32.totalorder %s19, 0
    %p200 = por %p198, %p199
    %s201 = ssub.s32 %s20, %s32
    %p202 = scmp.eq.s32.totalorder %s201, 0
    %s204 = sadd.s32 %s203, 1
    %s205 = scalar_select %p202, %s203, %s204
    %p208 = pneg %p202
    %p209 = scmp.eq.s32.totalorder %s13, 1
    %p210 = por %p208, %p209
    %p211 = scmp.ne.s32.totalorder %s203, %s206
    %p212 = scmp.eq.s32.totalorder %s13, 0
    %p213 = por %p211, %p212
    %p214 = scmp.ne.s32.totalorder %s203, %s206
    %p215 = scmp.eq.s32.totalorder %s18, 1
    %p216 = por %p214, %p215
    %p217 = scmp.ne.s32.totalorder %s206, %s207
    %p218 = scmp.eq.s32.totalorder %s18, 0
    %p219 = por %p217, %p218
    %p220 = scmp.ne.s32.totalorder %s206, %s207
    %p221 = scmp.eq.s32.totalorder %s19, 1
    %p222 = por %p220, %p221
    %p224 = scmp.ne.s32.totalorder %s207, %s223
    %p225 = scmp.eq.s32.totalorder %s19, 0
    %p226 = por %p224, %p225
    %p227 = scmp.le.s32.totalorder 1, %s13
    %p228 = scmp.lt.s32.totalorder %s13, 3
    %p229 = pnand %p227, %p228
    %p230 = pneg %p229
    // Predicated region
    $region9: #{encoder_classifier_mamba_forward.2} parent=5 // pred_check
      _
    $region10: #{encoder_classifier_mamba_forward.2} parent=5 // pred_check_branch
      %232 = sbr.rel (%p229) target = $region12
    $region11: #{encoder_classifier_mamba_forward.2} parent=5 // pred_region
      %s233 = ssub.s32 %s13, 1
      // Predicated region
      $region13: #{encoder_classifier_mamba_forward.2} parent=11 // pred_check
        %p234 = pneg %p130
      $region14: #{encoder_classifier_mamba_forward.2} parent=11 // pred_check_branch
        %236 = sbr.rel (%p234) target = $region16
      $region15: #{encoder_classifier_mamba_forward.2} parent=11 // pred_region
        _
      $region16: #{encoder_classifier_mamba_forward.2} parent=11 // pred_fallthru
        _
      // Predicated region
      $region17: #{encoder_classifier_mamba_forward.2} parent=11 // pred_check
        %p237 = pneg %p151
      $region18: #{encoder_classifier_mamba_forward.2} parent=11 // pred_check_branch
        %239 = sbr.rel (%p237) target = $region20
      $region19: #{encoder_classifier_mamba_forward.2} parent=11 // pred_region
        _
      $region20: #{encoder_classifier_mamba_forward.2} parent=11 // pred_fallthru
        _
      // Predicated region
      $region21: #{encoder_classifier_mamba_forward.2} parent=11 // pred_check
        %p240 = pneg %p172
      $region22: #{encoder_classifier_mamba_forward.2} parent=11 // pred_check_branch
        %242 = sbr.rel (%p240) target = $region24
      $region23: #{encoder_classifier_mamba_forward.2} parent=11 // pred_region
        _
      $region24: #{encoder_classifier_mamba_forward.2} parent=11 // pred_fallthru
        _
      // Predicated region
      $region25: #{encoder_classifier_mamba_forward.2} parent=11 // pred_check
        %p243 = pneg %p193
      $region26: #{encoder_classifier_mamba_forward.2} parent=11 // pred_check_branch
        %245 = sbr.rel (%p243) target = $region28
      $region27: #{encoder_classifier_mamba_forward.2} parent=11 // pred_region
        _
      $region28: #{encoder_classifier_mamba_forward.2} parent=11 // pred_fallthru
        _
    $region12: #{encoder_classifier_mamba_forward.2} parent=5 // pred_fallthru
      _
    %p246 = scmp.lt.s32.totalorder %s13, 2
    // Predicated region
    $region29: #{encoder_classifier_mamba_forward.2} parent=5 // pred_check
      %p247 = pneg %p246
    $region30: #{encoder_classifier_mamba_forward.2} parent=5 // pred_check_branch
      %249 = sbr.rel (%p247) target = $region32
    $region31: #{encoder_classifier_mamba_forward.2} parent=5 // pred_region
      // Predicated region
      $region33: #{encoder_classifier_mamba_forward.2} parent=31 // pred_check
        %p250 = pneg %p47
      $region34: #{encoder_classifier_mamba_forward.2} parent=31 // pred_check_branch
        %252 = sbr.rel (%p250) target = $region36
      $region35: #{encoder_classifier_mamba_forward.2} parent=31 // pred_region
        %s253 = smul.u32 2, %s21
        %p254 = scmp.lt.s32.totalorder %s20, 1
        %s255 = scalar_select %p254, %s20, 1
        %p256 = scmp.lt.s32.totalorder %s253, 1
        %s257 = scalar_select %p256, %s253, 1
        %s258 = smul.addr %s255, 2
        %s259 = sadd.s32 %s257, %s258
        %s260 = smul.addr %s259, 8
        %s261 = scalar_lea.vmem %s0, %s260
        %s262 = smul.u32 2, %s21
      $region36: #{encoder_classifier_mamba_forward.2} parent=31 // pred_fallthru
        _
      // Predicated region
      $region37: #{encoder_classifier_mamba_forward.2} parent=31 // pred_check
        %p263 = pneg %p75
      $region38: #{encoder_classifier_mamba_forward.2} parent=31 // pred_check_branch
        %265 = sbr.rel (%p263) target = $region40
      $region39: #{encoder_classifier_mamba_forward.2} parent=31 // pred_region
        %s266 = smul.u32 2, %s21
        %p267 = scmp.lt.s32.totalorder %s20, 1
        %s268 = scalar_select %p267, %s20, 1
        %p269 = scmp.lt.s32.totalorder %s266, 1
        %s270 = scalar_select %p269, %s266, 1
        %s271 = smul.addr %s268, 2
        %s272 = sadd.s32 %s270, %s271
        %s273 = smul.addr %s272, 8
        %s274 = scalar_lea.vmem %s1, %s273
        %s275 = smul.u32 2, %s21
      $region40: #{encoder_classifier_mamba_forward.2} parent=31 // pred_fallthru
        _
      // Predicated region
      $region41: #{encoder_classifier_mamba_forward.2} parent=31 // pred_check
        %p276 = pneg %p103
      $region42: #{encoder_classifier_mamba_forward.2} parent=31 // pred_check_branch
        %278 = sbr.rel (%p276) target = $region44
      $region43: #{encoder_classifier_mamba_forward.2} parent=31 // pred_region
        %s279 = smul.u32 2, %s21
        %p280 = scmp.lt.s32.totalorder %s20, 1
        %s281 = scalar_select %p280, %s20, 1
        %p282 = scmp.lt.s32.totalorder %s279, 1
        %s283 = scalar_select %p282, %s279, 1
        %s284 = smul.addr %s281, 2
        %s285 = sadd.s32 %s283, %s284
        %s286 = smul.addr %s285, 8
        %s287 = scalar_lea.vmem %s2, %s286
        %s288 = smul.u32 2, %s21
      $region44: #{encoder_classifier_mamba_forward.2} parent=31 // pred_fallthru
        _
    $region32: #{encoder_classifier_mamba_forward.2} parent=5 // pred_fallthru
      _
    %p289 = scmp.le.s32.totalorder 1, %s13
    %p290 = scmp.lt.s32.totalorder %s13, 3
    %p291 = pnand %p289, %p290
    %p292 = pneg %p291
    // Predicated region
    $region45: #{encoder_classifier_mamba_forward.2} parent=5 // pred_check
      _
    $region46: #{encoder_classifier_mamba_forward.2} parent=5 // pred_check_branch
      %294 = sbr.rel (%p291) target = $region48
    $region47: #{encoder_classifier_mamba_forward.2} parent=5 // pred_region
      %s295 = ssub.s32 %s13, 1
      %s296 = smul.u32 2, %s23
      %p297 = scmp.lt.s32.totalorder %s22, 1
      %s298 = scalar_select %p297, %s22, 1
      %p299 = scmp.lt.s32.totalorder %s296, 1
      %s300 = scalar_select %p299, %s296, 1
      %s301 = smul.addr %s298, 2
      %s302 = sadd.s32 %s300, %s301
      %s303 = smul.addr %s302, 8
      %s304 = scalar_lea.vmem %s0, %s303
      %p305 = pneg %p53
      %p306 = pneg %p50
      %s307 = smul.u32 2, %s23
      %p308 = scmp.lt.s32.totalorder %s22, 1
      %s309 = scalar_select %p308, %s22, 1
      %p310 = scmp.lt.s32.totalorder %s307, 1
      %s311 = scalar_select %p310, %s307, 1
      %s312 = smul.addr %s309, 2
      %s313 = sadd.s32 %s311, %s312
      %s314 = smul.addr %s313, 8
      %s315 = scalar_lea.vmem %s1, %s314
      %p316 = pneg %p81
      %p317 = pneg %p78
      %s318 = smul.u32 2, %s23
      %p319 = scmp.lt.s32.totalorder %s22, 1
      %s320 = scalar_select %p319, %s22, 1
      %p321 = scmp.lt.s32.totalorder %s318, 1
      %s322 = scalar_select %p321, %s318, 1
      %s323 = smul.addr %s320, 2
      %s324 = sadd.s32 %s322, %s323
      %s325 = smul.addr %s324, 8
      %s326 = scalar_lea.vmem %s2, %s325
      %p327 = pneg %p109
      %p328 = pneg %p106
      %p329 = pneg %p130
      %p330 = pneg %p127
      %p331 = pneg %p151
      %p332 = pneg %p148
      %p333 = pneg %p172
      %p334 = pneg %p169
      %p335 = pneg %p193
      %p336 = pneg %p190
      %p337 = pneg %p219
      %p338 = pneg %p216
      %p339 = scmp.lt.s32.totalorder %s22, 1
      %s340 = scalar_select %p339, %s22, 1
      %s341 = scalar_lea.vmem %s7, %s340
      %s342 = smul.u32 2, %s23
      %p343 = scmp.lt.s32.totalorder %s22, 1
      %s344 = scalar_select %p343, %s22, 1
      %p345 = scmp.lt.s32.totalorder %s342, 1
      %s346 = scalar_select %p345, %s342, 1
      %s347 = smul.addr %s344, 2
      %s348 = sadd.s32 %s346, %s347
      %s349 = smul.addr %s348, 8
      %s350 = scalar_lea.vmem %s0, %s349
      %s351 = smul.u32 2, %s23
      %s352 = smul.u32 2, %s23
      %p353 = scmp.lt.s32.totalorder %s22, 1
      %s354 = scalar_select %p353, %s22, 1
      %p355 = scmp.lt.s32.totalorder %s352, 1
      %s356 = scalar_select %p355, %s352, 1
      %s357 = smul.addr %s354, 2
      %s358 = sadd.s32 %s356, %s357
      %s359 = smul.addr %s358, 8
      %s360 = scalar_lea.vmem %s1, %s359
      %s361 = smul.u32 2, %s23
      %s362 = smul.u32 2, %s23
      %p363 = scmp.lt.s32.totalorder %s22, 1
      %s364 = scalar_select %p363, %s22, 1
      %p365 = scmp.lt.s32.totalorder %s362, 1
      %s366 = scalar_select %p365, %s362, 1
      %s367 = smul.addr %s364, 2
      %s368 = sadd.s32 %s366, %s367
      %s369 = smul.addr %s368, 8
      %s370 = scalar_lea.vmem %s2, %s369
      %s371 = smul.u32 2, %s23
      %p372 = scmp.lt.s32.totalorder %s22, 1
      %s373 = scalar_select %p372, %s22, 1
      %s374 = scalar_lea.vmem %s7, %s373
      %p375 = scmp.eq.s32.totalorder %s23, 0
      // Predicated region
      $region49: #{encoder_classifier_mamba_forward.2} parent=47 // pred_check
        %p376 = pneg %p375
      $region50: #{encoder_classifier_mamba_forward.2} parent=47 // pred_check_branch
        %378 = sbr.rel (%p376) target = $region52
      $region51: #{encoder_classifier_mamba_forward.2} parent=47 // pred_region
        %379 = vst [vmem:[#allocation2] sm:$0x1] 0.0
        %vm380 = vcmask 0
        %381 = vst.msk [vmem:[#allocation3] sm:$0x1] %vm380, 0.0
      $region52: #{encoder_classifier_mamba_forward.2} parent=47 // pred_fallthru
        _
      %v382 = vld [vmem:[%s350] sm:$0xff]
      %v383 = vld [vmem:[%s350 + $0x8] sm:$0xff]
      %v384 = vld [vmem:[%s360] sm:$0xff]
      %v385 = vld [vmem:[%s360 + $0x8] sm:$0xff]
      %v386 = vld [vmem:[%s370] sm:$0xff]
      %v387 = vld [vmem:[%s370 + $0x8] sm:$0xff]
      %vm388 = vcmp.ne.f32.partialorder %v382, 0.0
      %vm389 = vcmp.ne.f32.partialorder %v383, 0.0
      %v390 = vsel %vm388, 1, 0
      %v391 = vsel %vm389, 1, 0
      %v392 = vcvt.s32.f32 %v390
      %v393 = vcvt.s32.f32 %v391
      %vm394 = vcmask 64512
      %v395 = vsel %vm394, %v392, 0.0
      %396 = vadd.xlane.f32.xlu0 %v395
      %v397 = vpop.xlane.xlu0 %396
      %v398 = vsel %vm394, %v393, 0.0
      %399 = vadd.xlane.f32.xlu0 %v398
      %v400 = vpop.xlane.xlu0 %399
      %vm401 = vcmp.ne.f32.partialorder %v384, 0.0
      %vm402 = vcmp.ne.f32.partialorder %v385, 0.0
      %v403 = vsel %vm401, 1, 0
      %v404 = vsel %vm402, 1, 0
      %v405 = vcvt.s32.f32 %v403
      %v406 = vcvt.s32.f32 %v404
      %v407 = vsel %vm394, %v405, 0.0
      %408 = vadd.xlane.f32.xlu0 %v407
      %v409 = vpop.xlane.xlu0 %408
      %v410 = vsel %vm394, %v406, 0.0
      %411 = vadd.xlane.f32.xlu0 %v410
      %v412 = vpop.xlane.xlu0 %411
      %v413 = vadd.f32 %v397, %v409
      %v414 = vadd.f32 %v400, %v412
      %vm415 = vcmp.gt.f32.partialorder %v413, 0.0
      %vm416 = vcmp.gt.f32.partialorder %v414, 0.0
      %v417 = vsel %vm415, 1, 0
      %v418 = vsel %vm416, 1, 0
      %v419 = vcvt.s32.f32 %v417
      %v420 = vcvt.s32.f32 %v418
      %v421 = vld [vmem:[%s3] sm:$0xff]
      %v422 = vld [vmem:[%s4] sm:$0xff]
      %v424 = vsel %vm394, %v384, 0
      %v427 = vsel %vm394, %v385, 0
      %429 = vmatprep.subr.mxu0 0.0
      %430 = vmatpush1.msra.mxu0 0.0
      %431 = vmatprep.subr.mxu0 0.0
      %432 = vmatpush1.msra.mxu0 0.0
      %433 = vmatprep.subr.mxu0 0.0
      %434 = vmatpush1.msra.mxu0 0.0
      %435 = vmatprep.subr.mxu0 0.0
      %436 = vmatpush1.msra.mxu0 0.0
      %437 = vmatprep.subr.mxu0 0.0
      %438 = vmatpush1.msra.mxu0 0.0
      %439 = vmatprep.subr.mxu0 0.0
      %440 = vmatpush1.msra.mxu0 0.0
      %441 = vmatprep.subr.mxu0 0.0
      %442 = vmatpush1.msra.mxu0 0.0
      %443 = vmatprep.subr.mxu0 0.0
      %444 = vmatpush1.msra.mxu0 0.0
      %445 = vmatprep.subr.mxu0 0.0
      %446 = vmatpush1.msra.mxu0 0.0
      %447 = vmatprep.subr.mxu0 0.0
      %448 = vmatpush1.msra.mxu0 0.0
      %449 = vmatprep.subr.mxu0 0.0
      %450 = vmatpush1.msra.mxu0 0.0
      %451 = vmatprep.subr.mxu0 0.0
      %452 = vmatpush1.msra.mxu0 0.0
      %453 = vmatprep.subr.mxu0 0.0
      %454 = vmatpush1.msra.mxu0 0.0
      %455 = vmatprep.subr.mxu0 0.0
      %456 = vmatpush1.msra.mxu0 0.0
      %457 = vmatprep.subr.mxu0 0.0
      %458 = vmatpush1.msra.mxu0 0.0
      %459 = vmatprep.subr.mxu0 0.0
      %460 = vmatpush1.msra.mxu0 %v422
      %461 = vmatprep.subr.mxu0 0.0
      %462 = vmatpush2.msra.mxu0 0.0
      %463 = vmatprep.subr.mxu0 0.0
      %464 = vmatpush2.msra.mxu0 0.0
      %465 = vmatprep.subr.mxu0 0.0
      %466 = vmatpush2.msra.mxu0 0.0
      %467 = vmatprep.subr.mxu0 0.0
      %468 = vmatpush2.msra.mxu0 0.0
      %469 = vmatprep.subr.mxu0 0.0
      %470 = vmatpush2.msra.mxu0 0.0
      %471 = vmatprep.subr.mxu0 0.0
      %472 = vmatpush2.msra.mxu0 0.0
      %473 = vmatprep.subr.mxu0 0.0
      %474 = vmatpush2.msra.mxu0 0.0
      %475 = vmatprep.subr.mxu0 0.0
      %476 = vmatpush2.msra.mxu0 0.0
      %477 = vmatprep.subr.mxu0 0.0
      %478 = vmatpush2.msra.mxu0 0.0
      %479 = vmatprep.subr.mxu0 0.0
      %480 = vmatpush2.msra.mxu0 0.0
      %481 = vmatprep.subr.mxu0 0.0
      %482 = vmatpush2.msra.mxu0 0.0
      %483 = vmatprep.subr.mxu0 0.0
      %484 = vmatpush2.msra.mxu0 0.0
      %485 = vmatprep.subr.mxu0 0.0
      %486 = vmatpush2.msra.mxu0 0.0
      %487 = vmatprep.subr.mxu0 0.0
      %488 = vmatpush2.msra.mxu0 0.0
      %489 = vmatprep.subr.mxu0 0.0
      %490 = vmatpush2.msra.mxu0 0.0
      %491 = vmatprep.subr.mxu0 0.0
      %492 = vmatpush2.msra.mxu0 0.0
      %493 = vmatprep.mubr.f32.mxu0 0.0
      %494 = vmatmul.mubr.f32.gmra.mxu0 %v424
      %v495 = vpop.f32.mrf.mxu0
      %v496 = vadd.f32 0.0, %v495
      %v497 = vpop.f32.mrf.mxu0
      %498 = vmatprep.mubr.f32.mxu0 0.0
      %499 = vmatmul.mubr.f32.gmra.mxu0 %v427
      %v500 = vpop.f32.mrf.mxu0
      %v501 = vadd.f32 0.0, %v500
      %v502 = vpop.f32.mrf.mxu0
      %503 = vdwg.mxu0
      %v505 = vsel %vm394, %v382, 0
      %v508 = vsel %vm394, %v383, 0
      %510 = vmatprep.subr.mxu0 0.0
      %511 = vmatpush1.msra.mxu0 0.0
      %512 = vmatprep.subr.mxu0 0.0
      %513 = vmatpush1.msra.mxu0 0.0
      %514 = vmatprep.subr.mxu0 0.0
      %515 = vmatpush1.msra.mxu0 0.0
      %516 = vmatprep.subr.mxu0 0.0
      %517 = vmatpush1.msra.mxu0 0.0
      %518 = vmatprep.subr.mxu0 0.0
      %519 = vmatpush1.msra.mxu0 0.0
      %520 = vmatprep.subr.mxu0 0.0
      %521 = vmatpush1.msra.mxu0 0.0
      %522 = vmatprep.subr.mxu0 0.0
      %523 = vmatpush1.msra.mxu0 0.0
      %524 = vmatprep.subr.mxu0 0.0
      %525 = vmatpush1.msra.mxu0 0.0
      %526 = vmatprep.subr.mxu0 0.0
      %527 = vmatpush1.msra.mxu0 0.0
      %528 = vmatprep.subr.mxu0 0.0
      %529 = vmatpush1.msra.mxu0 0.0
      %530 = vmatprep.subr.mxu0 0.0
      %531 = vmatpush1.msra.mxu0 0.0
      %532 = vmatprep.subr.mxu0 0.0
      %533 = vmatpush1.msra.mxu0 0.0
      %534 = vmatprep.subr.mxu0 0.0
      %535 = vmatpush1.msra.mxu0 0.0
      %536 = vmatprep.subr.mxu0 0.0
      %537 = vmatpush1.msra.mxu0 0.0
      %538 = vmatprep.subr.mxu0 0.0
      %539 = vmatpush1.msra.mxu0 0.0
      %540 = vmatprep.subr.mxu0 0.0
      %541 = vmatpush1.msra.mxu0 %v421
      %542 = vmatprep.subr.mxu0 0.0
      %543 = vmatpush2.msra.mxu0 0.0
      %544 = vmatprep.subr.mxu0 0.0
      %545 = vmatpush2.msra.mxu0 0.0
      %546 = vmatprep.subr.mxu0 0.0
      %547 = vmatpush2.msra.mxu0 0.0
      %548 = vmatprep.subr.mxu0 0.0
      %549 = vmatpush2.msra.mxu0 0.0
      %550 = vmatprep.subr.mxu0 0.0
      %551 = vmatpush2.msra.mxu0 0.0
      %552 = vmatprep.subr.mxu0 0.0
      %553 = vmatpush2.msra.mxu0 0.0
      %554 = vmatprep.subr.mxu0 0.0
      %555 = vmatpush2.msra.mxu0 0.0
      %556 = vmatprep.subr.mxu0 0.0
      %557 = vmatpush2.msra.mxu0 0.0
      %558 = vmatprep.subr.mxu0 0.0
      %559 = vmatpush2.msra.mxu0 0.0
      %560 = vmatprep.subr.mxu0 0.0
      %561 = vmatpush2.msra.mxu0 0.0
      %562 = vmatprep.subr.mxu0 0.0
      %563 = vmatpush2.msra.mxu0 0.0
      %564 = vmatprep.subr.mxu0 0.0
      %565 = vmatpush2.msra.mxu0 0.0
      %566 = vmatprep.subr.mxu0 0.0
      %567 = vmatpush2.msra.mxu0 0.0
      %568 = vmatprep.subr.mxu0 0.0
      %569 = vmatpush2.msra.mxu0 0.0
      %570 = vmatprep.subr.mxu0 0.0
      %571 = vmatpush2.msra.mxu0 0.0
      %572 = vmatprep.subr.mxu0 0.0
      %573 = vmatpush2.msra.mxu0 0.0
      %574 = vmatprep.mubr.f32.mxu0 0.0
      %575 = vmatmul.mubr.f32.gmra.mxu0 %v505
      %v576 = vpop.f32.mrf.mxu0
      %v577 = vadd.f32 %v496, %v576
      %v578 = vpop.f32.mrf.mxu0
      %579 = vmatprep.mubr.f32.mxu0 0.0
      %580 = vmatmul.mubr.f32.gmra.mxu0 %v508
      %v581 = vpop.f32.mrf.mxu0
      %v582 = vadd.f32 %v501, %v581
      %v583 = vpop.f32.mrf.mxu0
      %584 = vdwg.mxu0
      %v585 = vld [vmem:[%s5] sm:$0x1]
      %587 = vset.pattern.permute.xlu0 0
      %588 = vperm.xlu0 %587, %v386
      %v589 = vpop.permute.xlu0 %588
      %592 = vset.pattern.permute.xlu0 0
      %593 = vperm.xlu0 %592, %v387
      %v594 = vpop.permute.xlu0 %593
      %v597 = vlaneseq
      %v598 = vshrl.u32 %v597, 7
      %v599 = vsub.s32 0, %v598
      %v600 = vrot.slane %v585, %v599
      %v602 = vmul.f32 %v589, %v600
      %v603 = vmul.f32 %v594, %v600
      %v604 = vadd.f32 %v577, %v602
      %v605 = vadd.f32 %v582, %v603
      %v606 = vld [vmem:[%s6] sm:$0x1]
      %v608 = vlaneseq
      %v609 = vshrl.u32 %v608, 7
      %v610 = vsub.s32 0, %v609
      %v611 = vrot.slane %v606, %v610
      %v613 = vadd.f32 %v604, %v611
      %v614 = vadd.f32 %v605, %v611
      %v615 = vld [vmem:[#allocation2] sm:$0x1]
      %v616 = vmul.f32 %v613, %v419
      %v617 = vmul.f32 %v614, %v420
      %v618 = vadd.f32 %v616, %v617
      %v619 = vrot.slane %v618, 4
      %v620 = vadd.f32 %v618, %v619
      %v621 = vrot.slane %v620, 2
      %v622 = vadd.f32 %v620, %v621
      %v623 = vrot.slane %v622, 1
      %v624 = vadd.f32 %v622, %v623
      %v625 = vadd.f32 %v615, %v624
      %626 = vst [vmem:[#allocation2] sm:$0x1] %v625
      %v627 = vld [vmem:[#allocation3] sm:$0x1]
      %v628 = vadd.f32 %v419, %v420
      %v629 = vrot.slane %v628, 4
      %v630 = vadd.f32 %v628, %v629
      %v631 = vrot.slane %v630, 2
      %v632 = vadd.f32 %v630, %v631
      %v633 = vrot.slane %v632, 1
      %v634 = vadd.f32 %v632, %v633
      %v635 = vadd.f32 %v627, %v634
      %vm636 = vcmask 0
      %637 = vst.msk [vmem:[#allocation3] sm:$0x1] %vm636, %v635
      // Predicated region
      $region53: #{encoder_classifier_mamba_forward.2} parent=47 // pred_check
        %p638 = pneg %p375
      $region54: #{encoder_classifier_mamba_forward.2} parent=47 // pred_check_branch
        %640 = sbr.rel (%p638) target = $region56
      $region55: #{encoder_classifier_mamba_forward.2} parent=47 // pred_region
        %v641 = vld [vmem:[#allocation3] sm:$0x1]
        %v642 = vmax.f32 %v641, 1e-09
        %v643 = vrcp.pop %v642
        %v644 = vld [vmem:[#allocation2] sm:$0x1]
        %646 = vset.pattern.permute.xlu0 0
        %647 = vperm.xlu0 %646, %v643
        %v648 = vpop.permute.xlu0 %647
        %v650 = vlaneseq
        %v651 = vshrl.u32 %v650, 7
        %v652 = vsub.s32 0, %v651
        %v653 = vrot.slane %v648, %v652
        %v654 = vmul.f32 %v644, %v653
        %655 = vst [vmem:[%s374] sm:$0x1] %v654
      $region56: #{encoder_classifier_mamba_forward.2} parent=47 // pred_fallthru
        _
      %p656 = scmp.lt.s32.totalorder %s22, 1
      %s657 = scalar_select %p656, %s22, 1
      %s658 = scalar_lea.vmem %s7, %s657
      // Predicated region
      $region57: #{encoder_classifier_mamba_forward.2} parent=47 // pred_check
        %p659 = pneg %p216
      $region58: #{encoder_classifier_mamba_forward.2} parent=47 // pred_check_branch
        %661 = sbr.rel (%p659) target = $region60
      $region59: #{encoder_classifier_mamba_forward.2} parent=47 // pred_region
        _
      $region60: #{encoder_classifier_mamba_forward.2} parent=47 // pred_fallthru
        _
    $region48: #{encoder_classifier_mamba_forward.2} parent=5 // pred_fallthru
      _
    %p662 = scmp.le.s32.totalorder 2, %s13
    // Predicated region
    $region61: #{encoder_classifier_mamba_forward.2} parent=5 // pred_check
      %p663 = pneg %p662
    $region62: #{encoder_classifier_mamba_forward.2} parent=5 // pred_check_branch
      %665 = sbr.rel (%p663) target = $region64
    $region63: #{encoder_classifier_mamba_forward.2} parent=5 // pred_region
      %s666 = ssub.s32 %s13, 2
      // Predicated region
      $region65: #{encoder_classifier_mamba_forward.2} parent=63 // pred_check
        %p667 = pneg %p222
      $region66: #{encoder_classifier_mamba_forward.2} parent=63 // pred_check_branch
        %669 = sbr.rel (%p667) target = $region68
      $region67: #{encoder_classifier_mamba_forward.2} parent=63 // pred_region
        %p670 = scmp.lt.s32.totalorder %s24, 1
        %s671 = scalar_select %p670, %s24, 1
        %s672 = scalar_lea.vmem %s7, %s671
      $region68: #{encoder_classifier_mamba_forward.2} parent=63 // pred_fallthru
        _
    $region64: #{encoder_classifier_mamba_forward.2} parent=5 // pred_fallthru
      _
  $region6: #{encoder_classifier_mamba_forward.2} parent=0 // loop_footer
    %s17 = sadd.s32 1, %s13
  $region7: #{encoder_classifier_mamba_forward.2} parent=0 // loop_footer_branch
    %12 = sbr.rel target = $region3
  $region8: #{encoder_classifier_mamba_forward.2} parent=0 // loop_exit
    _

</llo_original>
